<compile_context>
chip_gen: v5e
topology: v5e:2x2
jax: 0.10.0
libtpu: 0.0.40
codegen_flags: <defaults>
</compile_context>

<pallas_src>
import jax
import jax.numpy as jnp
from jax.experimental import pallas as pl
from jax.experimental.pallas import tpu as pltpu

IN_FEATURES = 28 * 28      # 784
D1, D2 = 512, 256
NEG_SLOPE = 0.2


def discriminator_kernel(x_ref, w1_ref, b1_ref, w2_ref, b2_ref, w3_ref, b3_ref,
                         out_ref):
    """One (TB, 784) f32 batch tile -> (TB, 1) f32 validity tile.

    MXU matmul operands are bf16 (cast in-kernel, hidden under the x DMA);
    accumulation / bias / LeakyReLU / sigmoid stay f32 on the VPU/EUP.
    The N=1 final layer is a VPU/XLU broadcast-mul + lane reduction instead of
    a wasted MXU pass.
    """
    x = x_ref[...].astype(w1_ref.dtype)                              # (TB, 784) bf16
    h1 = jnp.dot(x, w1_ref[...], preferred_element_type=jnp.float32) + b1_ref[...]
    h1 = jnp.where(h1 > 0, h1, NEG_SLOPE * h1)                       # (TB, 512) f32
    h2 = jnp.dot(h1.astype(w2_ref.dtype), w2_ref[...],
                 preferred_element_type=jnp.float32) + b2_ref[...]
    h2 = jnp.where(h2 > 0, h2, NEG_SLOPE * h2)                       # (TB, 256) f32
    # Layer 3: (TB,256) . (256,1) as broadcast-mul + lane reduce (XLU slot).
    h3 = jnp.sum(h2 * w3_ref[...], axis=-1, keepdims=True) + b3_ref[...]
    # NOTE: (TB, 1) output forces masked single-lane stores; output is only
    # 4*TB bytes per tile, so the cost is accepted knowingly.
    out_ref[...] = jax.nn.sigmoid(h3)


def prepare_params(params, matmul_dtype=jnp.bfloat16):
    """One-time weight reformat (outside the jitted forward): bf16 matmul weights,
    f32 biases / layer-3 row, shapes the kernel expects."""
    w1, b1, w2, b2, w3, b3 = params
    return (
        w1.astype(matmul_dtype),                   # (784, 512) bf16
        b1.reshape(1, D1).astype(jnp.float32),     # (1, 512)   f32
        w2.astype(matmul_dtype),                   # (512, 256) bf16
        b2.reshape(1, D2).astype(jnp.float32),     # (1, 256)   f32
        w3.reshape(1, D2).astype(jnp.float32),     # (1, 256)   f32 (VPU layer 3)
        b3.reshape(1, 1).astype(jnp.float32),      # (1, 1)     f32
    )


def _pick_batch_tile(B, block_b):
    """MXU-aligned batch tile.  Large tiles amortize per-grid-step overhead; shrink
    (never below 256) so the grid has >= 2 steps when B allows, which lets the
    'parallel' batch axis shard across both v7x TensorCores."""
    if B < 256:
        return max(8, pl.cdiv(B, 8) * 8)           # tiny batch: one small tile
    tb = block_b
    while tb > 256 and pl.cdiv(B, tb) < 2:
        tb //= 2
    return tb


def discriminator_forward(img, prepared_params, *, block_b=1024):
    """img: (B, 1, 28, 28) float32 -> (B, 1) float32 validity.

    `prepared_params` must come from prepare_params(); no per-call weight casts.
    """
    w1c, b1f, w2c, b2f, w3row, b3f = prepared_params
    B = img.shape[0]
    # == torch img.view(B, -1); stays f32, no pad / cast pass over the batch.
    x = img.reshape(B, IN_FEATURES).astype(jnp.float32)

    TB = _pick_batch_tile(B, block_b)
    B_pad = pl.cdiv(B, TB) * TB
    if B_pad != B:
        x = jnp.pad(x, ((0, B_pad - B), (0, 0)))   # zero rows; sliced off below
    grid = (B_pad // TB,)

    resident = lambda shape: pl.BlockSpec(shape, lambda i: (0, 0))

    out = pl.pallas_call(
        discriminator_kernel,
        out_shape=jax.ShapeDtypeStruct((B_pad, 1), jnp.float32),
        grid=grid,
        in_specs=[
            # x: batch-tiled, pipelined over the grid (784 == full array dim).
            # TODO(synk): if v6e profiling shows exposed x DMA, sweep
            # pipeline_mode=pl.Buffered(3) here or feed bf16 images upstream.
            pl.BlockSpec((TB, IN_FEATURES), lambda i: (i, 0)),
            resident((IN_FEATURES, D1)), resident((1, D1)),   # w1, b1 (VMEM-resident)
            resident((D1, D2)),          resident((1, D2)),   # w2, b2 (VMEM-resident)
            resident((1, D2)),           resident((1, 1)),    # w3 row, b3 (resident)
        ],
        out_specs=pl.BlockSpec((TB, 1), lambda i: (i, 0)),
        compiler_params=pltpu.CompilerParams(
            dimension_semantics=("parallel",),   # v7x: shard batch tiles over both TCs
            vmem_limit_bytes=32 << 20,           # TB=1024 f32 x + temporaries ~14 MiB
        ),
    )(x, w1c, b1f, w2c, b2f, w3row, b3f)
    return out[:B]


def init_params(key):
    """Deterministic init matching torch nn.Linear default (uniform +/- 1/sqrt(fan_in)),
    but weights stored as (in_features, out_features)."""
    dims = [(IN_FEATURES, D1), (D1, D2), (D2, 1)]
    params = []
    for fan_in, fan_out in dims:
        kw, kb, key = jax.random.split(key, 3)
        bound = 1.0 / (fan_in ** 0.5)
        w = jax.random.uniform(kw, (fan_in, fan_out), jnp.float32, -bound, bound)
        b = jax.random.uniform(kb, (1, fan_out), jnp.float32, -bound, bound)
        params.extend([w, b])
    return tuple(params)


if __name__ == "__main__":
    key = jax.random.PRNGKey(0)
    k_img, k_params = jax.random.split(key)

    B = 2
    img = jax.random.normal(k_img, (B, 1, 28, 28), dtype=jnp.float32)
    params = init_params(k_params)

    # Weight reformat happens once, outside the jitted forward.
    prepared = prepare_params(params)

    validity = jax.jit(discriminator_forward)(img, prepared)
    validity = jax.block_until_ready(validity)

    # Plain-JAX f32 reference (loose tolerance since kernel matmul operands are bf16).
    w1, b1, w2, b2, w3, b3 = params
    xf = img.reshape(B, -1)
    h = xf @ w1 + b1
    h = jnp.where(h > 0, h, NEG_SLOPE * h)
    h = h @ w2 + b2
    h = jnp.where(h > 0, h, NEG_SLOPE * h)
    ref = jax.nn.sigmoid(h @ w3 + b3)

    assert validity.shape == (B, 1)
    assert jnp.allclose(validity, ref, atol=2e-2, rtol=2e-2), (
        float(jnp.max(jnp.abs(validity - ref))))

    print("KERNEL_OK")
</pallas_src>

<mosaic_0001>
module attributes {stable_mosaic.version = 11 : i64} {
  func.func @discriminator_kernel(%arg0: i32, %arg1: memref<8x784xf32, #tpu.memory_space<vmem>>, %arg2: memref<784x512xbf16, #tpu.memory_space<vmem>>, %arg3: memref<1x512xf32, #tpu.memory_space<vmem>>, %arg4: memref<512x256xbf16, #tpu.memory_space<vmem>>, %arg5: memref<1x256xf32, #tpu.memory_space<vmem>>, %arg6: memref<1x256xf32, #tpu.memory_space<vmem>>, %arg7: memref<1x1xf32, #tpu.memory_space<vmem>>, %arg8: memref<8x1xf32, #tpu.memory_space<vmem>>) attributes {dimension_semantics = [#tpu.dimension_semantics<parallel>], iteration_bounds = array<i64: 1>, scalar_prefetch = 0 : i64, scratch_operands = 0 : i64, tpu.core_type = #tpu.core_type<tc>, window_params = [{transform_indices = @transform_0, window_bounds = array<i64: 8, 784>}, {pipeline_mode = #tpu.pipeline_mode<synchronous>, transform_indices = @transform_1, window_bounds = array<i64: 784, 512>}, {pipeline_mode = #tpu.pipeline_mode<synchronous>, transform_indices = @transform_2, window_bounds = array<i64: 1, 512>}, {pipeline_mode = #tpu.pipeline_mode<synchronous>, transform_indices = @transform_3, window_bounds = array<i64: 512, 256>}, {pipeline_mode = #tpu.pipeline_mode<synchronous>, transform_indices = @transform_4, window_bounds = array<i64: 1, 256>}, {pipeline_mode = #tpu.pipeline_mode<synchronous>, transform_indices = @transform_5, window_bounds = array<i64: 1, 256>}, {pipeline_mode = #tpu.pipeline_mode<synchronous>, transform_indices = @transform_6, window_bounds = array<i64: 1, 1>}, {transform_indices = @transform_7, window_bounds = array<i64: 8, 1>}]} {
    %c0 = arith.constant 0 : index
    %c0_0 = arith.constant 0 : index
    %0 = vector.load %arg1[%c0, %c0_0] : memref<8x784xf32, #tpu.memory_space<vmem>>, vector<8x784xf32>
    %1 = arith.truncf %0 : vector<8x784xf32> to vector<8x784xbf16>
    %c0_1 = arith.constant 0 : index
    %c0_2 = arith.constant 0 : index
    %2 = vector.load %arg2[%c0_1, %c0_2] : memref<784x512xbf16, #tpu.memory_space<vmem>>, vector<784x512xbf16>
    %cst = arith.constant dense<0.000000e+00> : vector<8x512xf32>
    %3 = tpu.matmul %1, %2, %cst {dimension_numbers = #tpu.dot_dimension_numbers<[1], [0], [0], [1], [0, 0, 1, 1], [], []>} : vector<8x784xbf16>, vector<784x512xbf16>, vector<8x512xf32> -> vector<8x512xf32>
    %c0_3 = arith.constant 0 : index
    %c0_4 = arith.constant 0 : index
    %4 = vector.load %arg3[%c0_3, %c0_4] : memref<1x512xf32, #tpu.memory_space<vmem>>, vector<1x512xf32>
    %5 = vector.broadcast %4 : vector<1x512xf32> to vector<8x512xf32>
    %6 = arith.addf %3, %5 : vector<8x512xf32>
    %cst_5 = arith.constant 0.000000e+00 : f32
    %7 = vector.broadcast %cst_5 : f32 to vector<8x512xf32>
    %8 = arith.cmpf ogt, %6, %7 : vector<8x512xf32>
    %cst_6 = arith.constant 2.000000e-01 : f32
    %9 = vector.broadcast %cst_6 : f32 to vector<8x512xf32>
    %10 = arith.mulf %9, %6 : vector<8x512xf32>
    %11 = arith.select %8, %6, %10 : vector<8x512xi1>, vector<8x512xf32>
    %12 = arith.truncf %11 : vector<8x512xf32> to vector<8x512xbf16>
    %c0_7 = arith.constant 0 : index
    %c0_8 = arith.constant 0 : index
    %13 = vector.load %arg4[%c0_7, %c0_8] : memref<512x256xbf16, #tpu.memory_space<vmem>>, vector<512x256xbf16>
    %cst_9 = arith.constant dense<0.000000e+00> : vector<8x256xf32>
    %14 = tpu.matmul %12, %13, %cst_9 {dimension_numbers = #tpu.dot_dimension_numbers<[1], [0], [0], [1], [0, 0, 1, 1], [], []>} : vector<8x512xbf16>, vector<512x256xbf16>, vector<8x256xf32> -> vector<8x256xf32>
    %c0_10 = arith.constant 0 : index
    %c0_11 = arith.constant 0 : index
    %15 = vector.load %arg5[%c0_10, %c0_11] : memref<1x256xf32, #tpu.memory_space<vmem>>, vector<1x256xf32>
    %16 = vector.broadcast %15 : vector<1x256xf32> to vector<8x256xf32>
    %17 = arith.addf %14, %16 : vector<8x256xf32>
    %cst_12 = arith.constant 0.000000e+00 : f32
    %18 = vector.broadcast %cst_12 : f32 to vector<8x256xf32>
    %19 = arith.cmpf ogt, %17, %18 : vector<8x256xf32>
    %cst_13 = arith.constant 2.000000e-01 : f32
    %20 = vector.broadcast %cst_13 : f32 to vector<8x256xf32>
    %21 = arith.mulf %20, %17 : vector<8x256xf32>
    %22 = arith.select %19, %17, %21 : vector<8x256xi1>, vector<8x256xf32>
    %c0_14 = arith.constant 0 : index
    %c0_15 = arith.constant 0 : index
    %23 = vector.load %arg6[%c0_14, %c0_15] : memref<1x256xf32, #tpu.memory_space<vmem>>, vector<1x256xf32>
    %24 = vector.broadcast %23 : vector<1x256xf32> to vector<8x256xf32>
    %25 = arith.mulf %22, %24 : vector<8x256xf32>
    %cst_16 = arith.constant dense<0.000000e+00> : vector<8xf32>
    %26 = vector.multi_reduction <add>, %25, %cst_16 [1] : vector<8x256xf32> to vector<8xf32>
    %27 = vector.shape_cast %26 : vector<8xf32> to vector<8x1xf32>
    %c0_17 = arith.constant 0 : index
    %c0_18 = arith.constant 0 : index
    %28 = vector.load %arg7[%c0_17, %c0_18] : memref<1x1xf32, #tpu.memory_space<vmem>>, vector<1x1xf32>
    %29 = vector.broadcast %28 : vector<1x1xf32> to vector<8x1xf32>
    %30 = arith.addf %27, %29 : vector<8x1xf32>
    %31 = arith.negf %30 : vector<8x1xf32>
    %32 = math.exp %31 : vector<8x1xf32>
    %cst_19 = arith.constant 1.000000e+00 : f32
    %33 = vector.broadcast %cst_19 : f32 to vector<8x1xf32>
    %34 = arith.addf %33, %32 : vector<8x1xf32>
    %35 = arith.divf %33, %34 : vector<8x1xf32>
    %c0_20 = arith.constant 0 : index
    %c0_21 = arith.constant 0 : index
    %36 = vector.load %arg8[%c0_20, %c0_21] : memref<8x1xf32, #tpu.memory_space<vmem>>, vector<8x1xf32>
    tpu.vector_store %arg8[%c0_20, %c0_21], %35 {strides = array<i32>} : memref<8x1xf32, #tpu.memory_space<vmem>>, vector<8x1xf32>,
    return
  }
  func.func @transform_0(%arg0: i32) -> (i32, i32) {
    %c0_i32 = arith.constant 0 : i32
    %c0_i32_0 = arith.constant 0 : i32
    return %arg0, %c0_i32 : i32, i32
  }
  func.func @transform_1(%arg0: i32) -> (i32, i32) {
    %c0_i32 = arith.constant 0 : i32
    %c0_i32_0 = arith.constant 0 : i32
    %c0_i32_1 = arith.constant 0 : i32
    return %c0_i32, %c0_i32_0 : i32, i32
  }
  func.func @transform_2(%arg0: i32) -> (i32, i32) {
    %c0_i32 = arith.constant 0 : i32
    %c0_i32_0 = arith.constant 0 : i32
    %c0_i32_1 = arith.constant 0 : i32
    return %c0_i32, %c0_i32_0 : i32, i32
  }
  func.func @transform_3(%arg0: i32) -> (i32, i32) {
    %c0_i32 = arith.constant 0 : i32
    %c0_i32_0 = arith.constant 0 : i32
    %c0_i32_1 = arith.constant 0 : i32
    return %c0_i32, %c0_i32_0 : i32, i32
  }
  func.func @transform_4(%arg0: i32) -> (i32, i32) {
    %c0_i32 = arith.constant 0 : i32
    %c0_i32_0 = arith.constant 0 : i32
    %c0_i32_1 = arith.constant 0 : i32
    return %c0_i32, %c0_i32_0 : i32, i32
  }
  func.func @transform_5(%arg0: i32) -> (i32, i32) {
    %c0_i32 = arith.constant 0 : i32
    %c0_i32_0 = arith.constant 0 : i32
    %c0_i32_1 = arith.constant 0 : i32
    return %c0_i32, %c0_i32_0 : i32, i32
  }
  func.func @transform_6(%arg0: i32) -> (i32, i32) {
    %c0_i32 = arith.constant 0 : i32
    %c0_i32_0 = arith.constant 0 : i32
    %c0_i32_1 = arith.constant 0 : i32
    return %c0_i32, %c0_i32_0 : i32, i32
  }
  func.func @transform_7(%arg0: i32) -> (i32, i32) {
    %c0_i32 = arith.constant 0 : i32
    %c0_i32_0 = arith.constant 0 : i32
    return %arg0, %c0_i32 : i32, i32
  }
}

</mosaic_0001>

<llo_original>
// kernel: discriminator_forward.1
$region0: #{discriminator_forward.1}
  #allocation0 [shape = 'u32[]', space=smem, size = 0x4, offset = 0x4, fixed_abs, tag = 'smem constant byte address 0x4 - core index']
  #allocation1 [shape = 'u32[72,128]{1,0:T(1,128)}', space=vmem, size = 0x9000, scoped, tag = 'internal scratch']
  #allocation2 [shape = 'f32[1,1]{1,0:T(1,128)S(1)}', space=vmem, size = 0x200, scoped, tag = 'scoped memory for discriminator_forward.1']
  %s0 = inlined_call_operand.vmem [shape: f32[8,784], index: 0, kind: input, shape index: {}]
  %s1 = inlined_call_operand.hbm [shape: bf16[784,512], index: 1, kind: input, shape index: {}]
  %s2 = inlined_call_operand.vmem [shape: f32[1,512], index: 2, kind: input, shape index: {}]
  %s3 = inlined_call_operand.hbm [shape: bf16[512,256], index: 3, kind: input, shape index: {}]
  %s4 = inlined_call_operand.vmem [shape: f32[1,256], index: 4, kind: input, shape index: {}]
  %s5 = inlined_call_operand.vmem [shape: f32[1,256], index: 5, kind: input, shape index: {}]
  %s6 = inlined_call_operand.<no memory space> [shape: f32[1,1], index: 6, kind: input, shape index: {}]
  %s7 = inlined_call_operand.vmem [shape: f32[8,1], index: 7, kind: output, shape index: {}]
  %s8 = sld [smem:[#allocation0]]
  $region46: #{discriminator_forward.1} parent=0
    _
  %s10 = ssub.s32 1, %s8
  %s11 = scalar_select 0, %s10, %s8
  %v12 = vstv %s6
  %13 = vst [vmem:[#allocation2] sm:$0x1] %v12
  $region1: #{discriminator_forward.1} parent=0
    #allocation3 [shape = 'u8[802816]{0}', space=vmem, size = 0xc4000, scoped, tag = 'input window, operand 1, single buffered']
    #allocation4 [shape = 's32[1]{0}', space=sflag, size = 0x4, scoped, tag = 'scoped memory for discriminator_forward.1']
    #allocation5 [shape = 'u8[262144]{0}', space=vmem, size = 0x40000, scoped, tag = 'input window, operand 3, single buffered']
    #allocation6 [shape = 's32[1]{0}', space=sflag, size = 0x4, scoped, tag = 'scoped memory for discriminator_forward.1']
    %14 = vsyncpa [#allocation4], 0
    %15 = vsyncpa [#allocation6], 0
    // Predicated region
    $region2: #{discriminator_forward.1} parent=1 // pred_check
      _
    $region3: #{discriminator_forward.1} parent=1 // pred_check_branch
      %17 = sbr.rel (0) target = $region5
    $region4: #{discriminator_forward.1} parent=1 // pred_region
      _
    $region5: #{discriminator_forward.1} parent=1 // pred_fallthru
      _
    // Predicated region
    $region6: #{discriminator_forward.1} parent=1 // pred_check
      _
    $region7: #{discriminator_forward.1} parent=1 // pred_check_branch
      %19 = sbr.rel (0) target = $region9
    $region8: #{discriminator_forward.1} parent=1 // pred_region
      %21 = vsyncadd [#allocation4], 0
      %s22 = sshll.u32 %s1, 4
      %s23 = int_to_ptr.hbm [resolvable:$true] %s22
      %s24 = sshll.u32 [#allocation3], 4
      %s25 = int_to_ptr.vmem [resolvable:$true] %s24
      %30 = dma.hbm_to_vmem [thread:$0]  %s23, 25088, %s25, [#allocation4], 256, 256, 16
    $region9: #{discriminator_forward.1} parent=1 // pred_fallthru
      _
    // Predicated region
    $region10: #{discriminator_forward.1} parent=1 // pred_check
      _
    $region11: #{discriminator_forward.1} parent=1 // pred_check_branch
      %32 = sbr.rel (0) target = $region13
    $region12: #{discriminator_forward.1} parent=1 // pred_region
      _
    $region13: #{discriminator_forward.1} parent=1 // pred_fallthru
      _
    // Predicated region
    $region14: #{discriminator_forward.1} parent=1 // pred_check
      _
    $region15: #{discriminator_forward.1} parent=1 // pred_check_branch
      %34 = sbr.rel (0) target = $region17
    $region16: #{discriminator_forward.1} parent=1 // pred_region
      %36 = vsyncadd [#allocation6], 0
      %s37 = sshll.u32 %s3, 4
      %s38 = int_to_ptr.hbm [resolvable:$true] %s37
      %s39 = sshll.u32 [#allocation5], 4
      %s40 = int_to_ptr.vmem [resolvable:$true] %s39
      %45 = dma.hbm_to_vmem [thread:$0]  %s38, 8192, %s40, [#allocation6], 128, 128, 8
    $region17: #{discriminator_forward.1} parent=1 // pred_fallthru
      _
    // Predicated region
    $region18: #{discriminator_forward.1} parent=1 // pred_check
      _
    $region19: #{discriminator_forward.1} parent=1 // pred_check_branch
      %47 = sbr.rel (0) target = $region21
    $region20: #{discriminator_forward.1} parent=1 // pred_region
      _
    $region21: #{discriminator_forward.1} parent=1 // pred_fallthru
      _
    // Predicated region
    $region22: #{discriminator_forward.1} parent=1 // pred_check
      _
    $region23: #{discriminator_forward.1} parent=1 // pred_check_branch
      %49 = sbr.rel (0) target = $region25
    $region24: #{discriminator_forward.1} parent=1 // pred_region
      _
    $region25: #{discriminator_forward.1} parent=1 // pred_fallthru
      _
    // Predicated region
    $region26: #{discriminator_forward.1} parent=1 // pred_check
      _
    $region27: #{discriminator_forward.1} parent=1 // pred_check_branch
      %51 = sbr.rel (0) target = $region29
    $region28: #{discriminator_forward.1} parent=1 // pred_region
      _
    $region29: #{discriminator_forward.1} parent=1 // pred_fallthru
      _
    // Predicated region
    $region30: #{discriminator_forward.1} parent=1 // pred_check
      _
    $region31: #{discriminator_forward.1} parent=1 // pred_check_branch
      %53 = sbr.rel (0) target = $region33
    $region32: #{discriminator_forward.1} parent=1 // pred_region
      %55 = dma.done [#allocation4], 25088
    $region33: #{discriminator_forward.1} parent=1 // pred_fallthru
      _
    // Predicated region
    $region34: #{discriminator_forward.1} parent=1 // pred_check
      _
    $region35: #{discriminator_forward.1} parent=1 // pred_check_branch
      %57 = sbr.rel (0) target = $region37
    $region36: #{discriminator_forward.1} parent=1 // pred_region
      %59 = dma.done [#allocation6], 8192
    $region37: #{discriminator_forward.1} parent=1 // pred_fallthru
      _
    %v61 = vld [vmem:[%s0] sm:$0xff]
    %v62 = vld [vmem:[%s0 + $0x8] sm:$0xff]
    %v63 = vld [vmem:[%s0 + $0x10] sm:$0xff]
    %v64 = vld [vmem:[%s0 + $0x18] sm:$0xff]
    %v65 = vld [vmem:[%s0 + $0x20] sm:$0xff]
    %v66 = vld [vmem:[%s0 + $0x28] sm:$0xff]
    %v67 = vld [vmem:[%s0 + $0x30] sm:$0xff]
    %v68 = vpack.c.bf16 %v61, %v61
    %v69 = vpack.c.bf16 %v62, %v62
    %v70 = vpack.c.bf16 %v63, %v63
    %v71 = vpack.c.bf16 %v64, %v64
    %v72 = vpack.c.bf16 %v65, %v65
    %v73 = vpack.c.bf16 %v66, %v66
    %v74 = vpack.c.bf16 %v67, %v67
    %v75 = vld [vmem:[#allocation3] sm:$0xff]
    %v76 = vld [vmem:[#allocation3 + $0x8] sm:$0xff]
    %v77 = vld [vmem:[#allocation3 + $0x10] sm:$0xff]
    %v78 = vld [vmem:[#allocation3 + $0x18] sm:$0xff]
    %v79 = vld [vmem:[#allocation3 + $0x20] sm:$0xff]
    %v80 = vld [vmem:[#allocation3 + $0x28] sm:$0xff]
    %v81 = vld [vmem:[#allocation3 + $0x30] sm:$0xff]
    %v82 = vld [vmem:[#allocation3 + $0x38] sm:$0xff]
    %v83 = vld [vmem:[#allocation3 + $0x40] sm:$0xff]
    %v84 = vld [vmem:[#allocation3 + $0x48] sm:$0xff]
    %v85 = vld [vmem:[#allocation3 + $0x50] sm:$0xff]
    %v86 = vld [vmem:[#allocation3 + $0x58] sm:$0xff]
    %v87 = vld [vmem:[#allocation3 + $0x60] sm:$0xff]
    %v88 = vld [vmem:[#allocation3 + $0x68] sm:$0xff]
    %v89 = vld [vmem:[#allocation3 + $0x70] sm:$0xff]
    %v90 = vld [vmem:[#allocation3 + $0x78] sm:$0xff]
    %v91 = vld [vmem:[#allocation3 + $0x80] sm:$0xff]
    %v92 = vld [vmem:[#allocation3 + $0x88] sm:$0xff]
    %v93 = vld [vmem:[#allocation3 + $0x90] sm:$0xff]
    %v94 = vld [vmem:[#allocation3 + $0x98] sm:$0xff]
    %v95 = vld [vmem:[#allocation3 + $0xa0] sm:$0xff]
    %v96 = vld [vmem:[#allocation3 + $0xa8] sm:$0xff]
    %v97 = vld [vmem:[#allocation3 + $0xb0] sm:$0xff]
    %v98 = vld [vmem:[#allocation3 + $0xb8] sm:$0xff]
    %v99 = vld [vmem:[#allocation3 + $0xc0] sm:$0xff]
    %v100 = vld [vmem:[#allocation3 + $0xc8] sm:$0xff]
    %v101 = vld [vmem:[#allocation3 + $0xd0] sm:$0xff]
    %v102 = vld [vmem:[#allocation3 + $0xd8] sm:$0xff]
    %v103 = vld [vmem:[#allocation3 + $0xe0] sm:$0xff]
    %v104 = vld [vmem:[#allocation3 + $0xe8] sm:$0xff]
    %v105 = vld [vmem:[#allocation3 + $0xf0] sm:$0xff]
    %v106 = vld [vmem:[#allocation3 + $0xf8] sm:$0xff]
    %v107 = vld [vmem:[#allocation3 + $0x100] sm:$0xff]
    %v108 = vld [vmem:[#allocation3 + $0x108] sm:$0xff]
    %v109 = vld [vmem:[#allocation3 + $0x110] sm:$0xff]
    %v110 = vld [vmem:[#allocation3 + $0x118] sm:$0xff]
    %v111 = vld [vmem:[#allocation3 + $0x120] sm:$0xff]
    %v112 = vld [vmem:[#allocation3 + $0x128] sm:$0xff]
    %v113 = vld [vmem:[#allocation3 + $0x130] sm:$0xff]
    %v114 = vld [vmem:[#allocation3 + $0x138] sm:$0xff]
    %v115 = vld [vmem:[#allocation3 + $0x140] sm:$0xff]
    %v116 = vld [vmem:[#allocation3 + $0x148] sm:$0xff]
    %v117 = vld [vmem:[#allocation3 + $0x150] sm:$0xff]
    %v118 = vld [vmem:[#allocation3 + $0x158] sm:$0xff]
    %v119 = vld [vmem:[#allocation3 + $0x160] sm:$0xff]
    %v120 = vld [vmem:[#allocation3 + $0x168] sm:$0xff]
    %v121 = vld [vmem:[#allocation3 + $0x170] sm:$0xff]
    %v122 = vld [vmem:[#allocation3 + $0x178] sm:$0xff]
    %v123 = vld [vmem:[#allocation3 + $0x180] sm:$0xff]
    %v124 = vld [vmem:[#allocation3 + $0x188] sm:$0xff]
    %v125 = vld [vmem:[#allocation3 + $0x190] sm:$0xff]
    %v126 = vld [vmem:[#allocation3 + $0x198] sm:$0xff]
    %v127 = vld [vmem:[#allocation3 + $0x1a0] sm:$0xff]
    %v128 = vld [vmem:[#allocation3 + $0x1a8] sm:$0xff]
    %v129 = vld [vmem:[#allocation3 + $0x1b0] sm:$0xff]
    %v130 = vld [vmem:[#allocation3 + $0x1b8] sm:$0xff]
    %v131 = vld [vmem:[#allocation3 + $0x1c0] sm:$0xff]
    %v132 = vld [vmem:[#allocation3 + $0x1c8] sm:$0xff]
    %v133 = vld [vmem:[#allocation3 + $0x1d0] sm:$0xff]
    %v134 = vld [vmem:[#allocation3 + $0x1d8] sm:$0xff]
    %v135 = vld [vmem:[#allocation3 + $0x1e0] sm:$0xff]
    %v136 = vld [vmem:[#allocation3 + $0x1e8] sm:$0xff]
    %v137 = vld [vmem:[#allocation3 + $0x1f0] sm:$0xff]
    %v138 = vld [vmem:[#allocation3 + $0x1f8] sm:$0xff]
    %v139 = vld [vmem:[#allocation3 + $0x200] sm:$0xff]
    %v140 = vld [vmem:[#allocation3 + $0x208] sm:$0xff]
    %v141 = vld [vmem:[#allocation3 + $0x210] sm:$0xff]
    %v142 = vld [vmem:[#allocation3 + $0x218] sm:$0xff]
    %v143 = vld [vmem:[#allocation3 + $0x220] sm:$0xff]
    %v144 = vld [vmem:[#allocation3 + $0x228] sm:$0xff]
    %v145 = vld [vmem:[#allocation3 + $0x230] sm:$0xff]
    %v146 = vld [vmem:[#allocation3 + $0x238] sm:$0xff]
    %v147 = vld [vmem:[#allocation3 + $0x240] sm:$0xff]
    %v148 = vld [vmem:[#allocation3 + $0x248] sm:$0xff]
    %v149 = vld [vmem:[#allocation3 + $0x250] sm:$0xff]
    %v150 = vld [vmem:[#allocation3 + $0x258] sm:$0xff]
    %v151 = vld [vmem:[#allocation3 + $0x260] sm:$0xff]
    %v152 = vld [vmem:[#allocation3 + $0x268] sm:$0xff]
    %v153 = vld [vmem:[#allocation3 + $0x270] sm:$0xff]
    %v154 = vld [vmem:[#allocation3 + $0x278] sm:$0xff]
    %v155 = vld [vmem:[#allocation3 + $0x280] sm:$0xff]
    %v156 = vld [vmem:[#allocation3 + $0x288] sm:$0xff]
    %v157 = vld [vmem:[#allocation3 + $0x290] sm:$0xff]
    %v158 = vld [vmem:[#allocation3 + $0x298] sm:$0xff]
    %v159 = vld [vmem:[#allocation3 + $0x2a0] sm:$0xff]
    %v160 = vld [vmem:[#allocation3 + $0x2a8] sm:$0xff]
    %v161 = vld [vmem:[#allocation3 + $0x2b0] sm:$0xff]
    %v162 = vld [vmem:[#allocation3 + $0x2b8] sm:$0xff]
    %v163 = vld [vmem:[#allocation3 + $0x2c0] sm:$0xff]
    %v164 = vld [vmem:[#allocation3 + $0x2c8] sm:$0xff]
    %v165 = vld [vmem:[#allocation3 + $0x2d0] sm:$0xff]
    %v166 = vld [vmem:[#allocation3 + $0x2d8] sm:$0xff]
    %v167 = vld [vmem:[#allocation3 + $0x2e0] sm:$0xff]
    %v168 = vld [vmem:[#allocation3 + $0x2e8] sm:$0xff]
    %v169 = vld [vmem:[#allocation3 + $0x2f0] sm:$0xff]
    %v170 = vld [vmem:[#allocation3 + $0x2f8] sm:$0xff]
    %v171 = vld [vmem:[#allocation3 + $0x300] sm:$0xff]
    %v172 = vld [vmem:[#allocation3 + $0x308] sm:$0xff]
    %v173 = vld [vmem:[#allocation3 + $0x310] sm:$0xff]
    %v174 = vld [vmem:[#allocation3 + $0x318] sm:$0xff]
    %v175 = vld [vmem:[#allocation3 + $0x320] sm:$0xff]
    %v176 = vld [vmem:[#allocation3 + $0x328] sm:$0xff]
    %v177 = vld [vmem:[#allocation3 + $0x330] sm:$0xff]
    %v178 = vld [vmem:[#allocation3 + $0x338] sm:$0xff]
    %v179 = vld [vmem:[#allocation3 + $0x340] sm:$0xff]
    %v180 = vld [vmem:[#allocation3 + $0x348] sm:$0xff]
    %v181 = vld [vmem:[#allocation3 + $0x350] sm:$0xff]
    %v182 = vld [vmem:[#allocation3 + $0x358] sm:$0xff]
    %v183 = vld [vmem:[#allocation3 + $0x360] sm:$0xff]
    %v184 = vld [vmem:[#allocation3 + $0x368] sm:$0xff]
    %v185 = vld [vmem:[#allocation3 + $0x370] sm:$0xff]
    %v186 = vld [vmem:[#allocation3 + $0x378] sm:$0xff]
    %v187 = vld [vmem:[#allocation3 + $0x380] sm:$0xff]
    %v188 = vld [vmem:[#allocation3 + $0x388] sm:$0xff]
    %v189 = vld [vmem:[#allocation3 + $0x390] sm:$0xff]
    %v190 = vld [vmem:[#allocation3 + $0x398] sm:$0xff]
    %v191 = vld [vmem:[#allocation3 + $0x3a0] sm:$0xff]
    %v192 = vld [vmem:[#allocation3 + $0x3a8] sm:$0xff]
    %v193 = vld [vmem:[#allocation3 + $0x3b0] sm:$0xff]
    %v194 = vld [vmem:[#allocation3 + $0x3b8] sm:$0xff]
    %v195 = vld [vmem:[#allocation3 + $0x3c0] sm:$0xff]
    %v196 = vld [vmem:[#allocation3 + $0x3c8] sm:$0xff]
    %v197 = vld [vmem:[#allocation3 + $0x3d0] sm:$0xff]
    %v198 = vld [vmem:[#allocation3 + $0x3d8] sm:$0xff]
    %v199 = vld [vmem:[#allocation3 + $0x3e0] sm:$0xff]
    %v200 = vld [vmem:[#allocation3 + $0x3e8] sm:$0xff]
    %v201 = vld [vmem:[#allocation3 + $0x3f0] sm:$0xff]
    %v202 = vld [vmem:[#allocation3 + $0x3f8] sm:$0xff]
    %v203 = vld [vmem:[#allocation3 + $0x400] sm:$0xff]
    %v204 = vld [vmem:[#allocation3 + $0x408] sm:$0xff]
    %v205 = vld [vmem:[#allocation3 + $0x410] sm:$0xff]
    %v206 = vld [vmem:[#allocation3 + $0x418] sm:$0xff]
    %v207 = vld [vmem:[#allocation3 + $0x420] sm:$0xff]
    %v208 = vld [vmem:[#allocation3 + $0x428] sm:$0xff]
    %v209 = vld [vmem:[#allocation3 + $0x430] sm:$0xff]
    %v210 = vld [vmem:[#allocation3 + $0x438] sm:$0xff]
    %v211 = vld [vmem:[#allocation3 + $0x440] sm:$0xff]
    %v212 = vld [vmem:[#allocation3 + $0x448] sm:$0xff]
    %v213 = vld [vmem:[#allocation3 + $0x450] sm:$0xff]
    %v214 = vld [vmem:[#allocation3 + $0x458] sm:$0xff]
    %v215 = vld [vmem:[#allocation3 + $0x460] sm:$0xff]
    %v216 = vld [vmem:[#allocation3 + $0x468] sm:$0xff]
    %v217 = vld [vmem:[#allocation3 + $0x470] sm:$0xff]
    %v218 = vld [vmem:[#allocation3 + $0x478] sm:$0xff]
    %v219 = vld [vmem:[#allocation3 + $0x480] sm:$0xff]
    %v220 = vld [vmem:[#allocation3 + $0x488] sm:$0xff]
    %v221 = vld [vmem:[#allocation3 + $0x490] sm:$0xff]
    %v222 = vld [vmem:[#allocation3 + $0x498] sm:$0xff]
    %v223 = vld [vmem:[#allocation3 + $0x4a0] sm:$0xff]
    %v224 = vld [vmem:[#allocation3 + $0x4a8] sm:$0xff]
    %v225 = vld [vmem:[#allocation3 + $0x4b0] sm:$0xff]
    %v226 = vld [vmem:[#allocation3 + $0x4b8] sm:$0xff]
    %v227 = vld [vmem:[#allocation3 + $0x4c0] sm:$0xff]
    %v228 = vld [vmem:[#allocation3 + $0x4c8] sm:$0xff]
    %v229 = vld [vmem:[#allocation3 + $0x4d0] sm:$0xff]
    %v230 = vld [vmem:[#allocation3 + $0x4d8] sm:$0xff]
    %v231 = vld [vmem:[#allocation3 + $0x4e0] sm:$0xff]
    %v232 = vld [vmem:[#allocation3 + $0x4e8] sm:$0xff]
    %v233 = vld [vmem:[#allocation3 + $0x4f0] sm:$0xff]
    %v234 = vld [vmem:[#allocation3 + $0x4f8] sm:$0xff]
    %v235 = vld [vmem:[#allocation3 + $0x500] sm:$0xff]
    %v236 = vld [vmem:[#allocation3 + $0x508] sm:$0xff]
    %v237 = vld [vmem:[#allocation3 + $0x510] sm:$0xff]
    %v238 = vld [vmem:[#allocation3 + $0x518] sm:$0xff]
    %v239 = vld [vmem:[#allocation3 + $0x520] sm:$0xff]
    %v240 = vld [vmem:[#allocation3 + $0x528] sm:$0xff]
    %v241 = vld [vmem:[#allocation3 + $0x530] sm:$0xff]
    %v242 = vld [vmem:[#allocation3 + $0x538] sm:$0xff]
    %v243 = vld [vmem:[#allocation3 + $0x540] sm:$0xff]
    %v244 = vld [vmem:[#allocation3 + $0x548] sm:$0xff]
    %v245 = vld [vmem:[#allocation3 + $0x550] sm:$0xff]
    %v246 = vld [vmem:[#allocation3 + $0x558] sm:$0xff]
    %v247 = vld [vmem:[#allocation3 + $0x560] sm:$0xff]
    %v248 = vld [vmem:[#allocation3 + $0x568] sm:$0xff]
    %v249 = vld [vmem:[#allocation3 + $0x570] sm:$0xff]
    %v250 = vld [vmem:[#allocation3 + $0x578] sm:$0xff]
    %v251 = vld [vmem:[#allocation3 + $0x580] sm:$0xff]
    %v252 = vld [vmem:[#allocation3 + $0x588] sm:$0xff]
    %v253 = vld [vmem:[#allocation3 + $0x590] sm:$0xff]
    %v254 = vld [vmem:[#allocation3 + $0x598] sm:$0xff]
    %v255 = vld [vmem:[#allocation3 + $0x5a0] sm:$0xff]
    %v256 = vld [vmem:[#allocation3 + $0x5a8] sm:$0xff]
    %v257 = vld [vmem:[#allocation3 + $0x5b0] sm:$0xff]
    %v258 = vld [vmem:[#allocation3 + $0x5b8] sm:$0xff]
    %v259 = vld [vmem:[#allocation3 + $0x5c0] sm:$0xff]
    %v260 = vld [vmem:[#allocation3 + $0x5c8] sm:$0xff]
    %v261 = vld [vmem:[#allocation3 + $0x5d0] sm:$0xff]
    %v262 = vld [vmem:[#allocation3 + $0x5d8] sm:$0xff]
    %v263 = vld [vmem:[#allocation3 + $0x5e0] sm:$0xff]
    %v264 = vld [vmem:[#allocation3 + $0x5e8] sm:$0xff]
    %v265 = vld [vmem:[#allocation3 + $0x5f0] sm:$0xff]
    %v266 = vld [vmem:[#allocation3 + $0x5f8] sm:$0xff]
    %v267 = vld [vmem:[#allocation3 + $0x600] sm:$0xff]
    %v268 = vld [vmem:[#allocation3 + $0x608] sm:$0xff]
    %v269 = vld [vmem:[#allocation3 + $0x610] sm:$0xff]
    %v270 = vld [vmem:[#allocation3 + $0x618] sm:$0xff]
    %v271 = vld [vmem:[%s2] sm:$0xf]
    %v273 = vperm.slane %v271, 0
    %v274 = vperm.slane %v271, 1
    %v275 = vperm.slane %v271, 2
    %v276 = vperm.slane %v271, 3
    %v477 = vunpack.c.l.b16 %v75
    %v478 = vunpack.c.h.b16 %v75
    %v479 = vunpack.c.l.b16 %v76
    %v480 = vunpack.c.h.b16 %v76
    %v481 = vunpack.c.l.b16 %v77
    %v482 = vunpack.c.h.b16 %v77
    %v483 = vunpack.c.l.b16 %v78
    %v484 = vunpack.c.h.b16 %v78
    %v485 = vunpack.c.l.b16 %v79
    %v486 = vunpack.c.h.b16 %v79
    %v487 = vunpack.c.l.b16 %v80
    %v488 = vunpack.c.h.b16 %v80
    %v489 = vunpack.c.l.b16 %v81
    %v490 = vunpack.c.h.b16 %v81
    %v491 = vunpack.c.l.b16 %v82
    %v492 = vunpack.c.h.b16 %v82
    %v493 = vunpack.c.l.b16 %v83
    %v494 = vunpack.c.h.b16 %v83
    %v495 = vunpack.c.l.b16 %v84
    %v496 = vunpack.c.h.b16 %v84
    %v497 = vunpack.c.l.b16 %v85
    %v498 = vunpack.c.h.b16 %v85
    %v499 = vunpack.c.l.b16 %v86
    %v500 = vunpack.c.h.b16 %v86
    %v501 = vunpack.c.l.b16 %v87
    %v502 = vunpack.c.h.b16 %v87
    %v503 = vunpack.c.l.b16 %v88
    %v504 = vunpack.c.h.b16 %v88
    %v505 = vunpack.c.l.b16 %v89
    %v506 = vunpack.c.h.b16 %v89
    %v507 = vunpack.c.l.b16 %v90
    %v508 = vunpack.c.h.b16 %v90
    %v509 = vunpack.c.l.b16 %v91
    %v510 = vunpack.c.h.b16 %v91
    %v511 = vunpack.c.l.b16 %v92
    %v512 = vunpack.c.h.b16 %v92
    %v513 = vunpack.c.l.b16 %v93
    %v514 = vunpack.c.h.b16 %v93
    %v515 = vunpack.c.l.b16 %v94
    %v516 = vunpack.c.h.b16 %v94
    %v517 = vunpack.c.l.b16 %v95
    %v518 = vunpack.c.h.b16 %v95
    %v519 = vunpack.c.l.b16 %v96
    %v520 = vunpack.c.h.b16 %v96
    %v521 = vunpack.c.l.b16 %v97
    %v522 = vunpack.c.h.b16 %v97
    %v523 = vunpack.c.l.b16 %v98
    %v524 = vunpack.c.h.b16 %v98
    %v525 = vunpack.c.l.b16 %v99
    %v526 = vunpack.c.h.b16 %v99
    %v527 = vunpack.c.l.b16 %v100
    %v528 = vunpack.c.h.b16 %v100
    %v529 = vunpack.c.l.b16 %v101
    %v530 = vunpack.c.h.b16 %v101
    %v531 = vunpack.c.l.b16 %v102
    %v532 = vunpack.c.h.b16 %v102
    %v533 = vunpack.c.l.b16 %v103
    %v534 = vunpack.c.h.b16 %v103
    %v535 = vunpack.c.l.b16 %v104
    %v536 = vunpack.c.h.b16 %v104
    %v537 = vunpack.c.l.b16 %v105
    %v538 = vunpack.c.h.b16 %v105
    %v539 = vunpack.c.l.b16 %v106
    %v540 = vunpack.c.h.b16 %v106
    %v541 = vunpack.c.l.b16 %v107
    %v542 = vunpack.c.h.b16 %v107
    %v543 = vunpack.c.l.b16 %v108
    %v544 = vunpack.c.h.b16 %v108
    %v545 = vunpack.c.l.b16 %v109
    %v546 = vunpack.c.h.b16 %v109
    %v547 = vunpack.c.l.b16 %v110
    %v548 = vunpack.c.h.b16 %v110
    %v549 = vunpack.c.l.b16 %v111
    %v550 = vunpack.c.h.b16 %v111
    %v551 = vunpack.c.l.b16 %v112
    %v552 = vunpack.c.h.b16 %v112
    %v553 = vunpack.c.l.b16 %v113
    %v554 = vunpack.c.h.b16 %v113
    %v555 = vunpack.c.l.b16 %v114
    %v556 = vunpack.c.h.b16 %v114
    %v557 = vunpack.c.l.b16 %v115
    %v558 = vunpack.c.h.b16 %v115
    %v559 = vunpack.c.l.b16 %v116
    %v560 = vunpack.c.h.b16 %v116
    %v561 = vunpack.c.l.b16 %v117
    %v562 = vunpack.c.h.b16 %v117
    %v563 = vunpack.c.l.b16 %v118
    %v564 = vunpack.c.h.b16 %v118
    %v565 = vunpack.c.l.b16 %v119
    %v566 = vunpack.c.h.b16 %v119
    %v567 = vunpack.c.l.b16 %v120
    %v568 = vunpack.c.h.b16 %v120
    %v569 = vunpack.c.l.b16 %v121
    %v570 = vunpack.c.h.b16 %v121
    %v571 = vunpack.c.l.b16 %v122
    %v572 = vunpack.c.h.b16 %v122
    %v573 = vunpack.c.l.b16 %v123
    %v574 = vunpack.c.h.b16 %v123
    %v575 = vunpack.c.l.b16 %v124
    %v576 = vunpack.c.h.b16 %v124
    %v577 = vunpack.c.l.b16 %v125
    %v578 = vunpack.c.h.b16 %v125
    %v579 = vunpack.c.l.b16 %v126
    %v580 = vunpack.c.h.b16 %v126
    %v581 = vunpack.c.l.b16 %v127
    %v582 = vunpack.c.h.b16 %v127
    %v583 = vunpack.c.l.b16 %v128
    %v584 = vunpack.c.h.b16 %v128
    %v585 = vunpack.c.l.b16 %v129
    %v586 = vunpack.c.h.b16 %v129
    %v587 = vunpack.c.l.b16 %v130
    %v588 = vunpack.c.h.b16 %v130
    %v589 = vunpack.c.l.b16 %v131
    %v590 = vunpack.c.h.b16 %v131
    %v591 = vunpack.c.l.b16 %v132
    %v592 = vunpack.c.h.b16 %v132
    %v593 = vunpack.c.l.b16 %v133
    %v594 = vunpack.c.h.b16 %v133
    %v595 = vunpack.c.l.b16 %v134
    %v596 = vunpack.c.h.b16 %v134
    %v597 = vunpack.c.l.b16 %v135
    %v598 = vunpack.c.h.b16 %v135
    %v599 = vunpack.c.l.b16 %v136
    %v600 = vunpack.c.h.b16 %v136
    %v601 = vunpack.c.l.b16 %v137
    %v602 = vunpack.c.h.b16 %v137
    %v603 = vunpack.c.l.b16 %v138
    %v604 = vunpack.c.h.b16 %v138
    %v605 = vunpack.c.l.b16 %v139
    %v606 = vunpack.c.h.b16 %v139
    %v607 = vunpack.c.l.b16 %v140
    %v608 = vunpack.c.h.b16 %v140
    %v609 = vunpack.c.l.b16 %v141
    %v610 = vunpack.c.h.b16 %v141
    %v611 = vunpack.c.l.b16 %v142
    %v612 = vunpack.c.h.b16 %v142
    %v613 = vunpack.c.l.b16 %v143
    %v614 = vunpack.c.h.b16 %v143
    %v615 = vunpack.c.l.b16 %v144
    %v616 = vunpack.c.h.b16 %v144
    %v617 = vunpack.c.l.b16 %v145
    %v618 = vunpack.c.h.b16 %v145
    %v619 = vunpack.c.l.b16 %v146
    %v620 = vunpack.c.h.b16 %v146
    %v621 = vunpack.c.l.b16 %v147
    %v622 = vunpack.c.h.b16 %v147
    %v623 = vunpack.c.l.b16 %v148
    %v624 = vunpack.c.h.b16 %v148
    %v625 = vunpack.c.l.b16 %v149
    %v626 = vunpack.c.h.b16 %v149
    %v627 = vunpack.c.l.b16 %v150
    %v628 = vunpack.c.h.b16 %v150
    %v629 = vunpack.c.l.b16 %v151
    %v630 = vunpack.c.h.b16 %v151
    %v631 = vunpack.c.l.b16 %v152
    %v632 = vunpack.c.h.b16 %v152
    %v633 = vunpack.c.l.b16 %v153
    %v634 = vunpack.c.h.b16 %v153
    %v635 = vunpack.c.l.b16 %v154
    %v636 = vunpack.c.h.b16 %v154
    %v637 = vunpack.c.l.b16 %v155
    %v638 = vunpack.c.h.b16 %v155
    %v639 = vunpack.c.l.b16 %v156
    %v640 = vunpack.c.h.b16 %v156
    %v641 = vunpack.c.l.b16 %v157
    %v642 = vunpack.c.h.b16 %v157
    %v643 = vunpack.c.l.b16 %v158
    %v644 = vunpack.c.h.b16 %v158
    %v645 = vunpack.c.l.b16 %v159
    %v646 = vunpack.c.h.b16 %v159
    %v647 = vunpack.c.l.b16 %v160
    %v648 = vunpack.c.h.b16 %v160
    %v649 = vunpack.c.l.b16 %v161
    %v650 = vunpack.c.h.b16 %v161
    %v651 = vunpack.c.l.b16 %v162
    %v652 = vunpack.c.h.b16 %v162
    %v653 = vunpack.c.l.b16 %v163
    %v654 = vunpack.c.h.b16 %v163
    %v655 = vunpack.c.l.b16 %v164
    %v656 = vunpack.c.h.b16 %v164
    %v657 = vunpack.c.l.b16 %v165
    %v658 = vunpack.c.h.b16 %v165
    %v659 = vunpack.c.l.b16 %v166
    %v660 = vunpack.c.h.b16 %v166
    %v661 = vunpack.c.l.b16 %v167
    %v662 = vunpack.c.h.b16 %v167
    %v663 = vunpack.c.l.b16 %v168
    %v664 = vunpack.c.h.b16 %v168
    %v665 = vunpack.c.l.b16 %v169
    %v666 = vunpack.c.h.b16 %v169
    %v667 = vunpack.c.l.b16 %v170
    %v668 = vunpack.c.h.b16 %v170
    %v669 = vunpack.c.l.b16 %v171
    %v670 = vunpack.c.h.b16 %v171
    %v671 = vunpack.c.l.b16 %v172
    %v672 = vunpack.c.h.b16 %v172
    %v673 = vunpack.c.l.b16 %v173
    %v674 = vunpack.c.h.b16 %v173
    %v675 = vunpack.c.l.b16 %v174
    %v676 = vunpack.c.h.b16 %v174
    %v677 = vunpack.c.l.b16 %v175
    %v678 = vunpack.c.h.b16 %v175
    %v679 = vunpack.c.l.b16 %v176
    %v680 = vunpack.c.h.b16 %v176
    %v681 = vunpack.c.l.b16 %v177
    %v682 = vunpack.c.h.b16 %v177
    %v683 = vunpack.c.l.b16 %v178
    %v684 = vunpack.c.h.b16 %v178
    %v685 = vunpack.c.l.b16 %v179
    %v686 = vunpack.c.h.b16 %v179
    %v687 = vunpack.c.l.b16 %v180
    %v688 = vunpack.c.h.b16 %v180
    %v689 = vunpack.c.l.b16 %v181
    %v690 = vunpack.c.h.b16 %v181
    %v691 = vunpack.c.l.b16 %v182
    %v692 = vunpack.c.h.b16 %v182
    %v693 = vunpack.c.l.b16 %v183
    %v694 = vunpack.c.h.b16 %v183
    %v695 = vunpack.c.l.b16 %v184
    %v696 = vunpack.c.h.b16 %v184
    %v697 = vunpack.c.l.b16 %v185
    %v698 = vunpack.c.h.b16 %v185
    %v699 = vunpack.c.l.b16 %v186
    %v700 = vunpack.c.h.b16 %v186
    %v701 = vunpack.c.l.b16 %v187
    %v702 = vunpack.c.h.b16 %v187
    %v703 = vunpack.c.l.b16 %v188
    %v704 = vunpack.c.h.b16 %v188
    %v705 = vunpack.c.l.b16 %v189
    %v706 = vunpack.c.h.b16 %v189
    %v707 = vunpack.c.l.b16 %v190
    %v708 = vunpack.c.h.b16 %v190
    %v709 = vunpack.c.l.b16 %v191
    %v710 = vunpack.c.h.b16 %v191
    %v711 = vunpack.c.l.b16 %v192
    %v712 = vunpack.c.h.b16 %v192
    %v713 = vunpack.c.l.b16 %v193
    %v714 = vunpack.c.h.b16 %v193
    %v715 = vunpack.c.l.b16 %v194
    %v716 = vunpack.c.h.b16 %v194
    %v717 = vunpack.c.l.b16 %v195
    %v718 = vunpack.c.h.b16 %v195
    %v719 = vunpack.c.l.b16 %v196
    %v720 = vunpack.c.h.b16 %v196
    %v721 = vunpack.c.l.b16 %v197
    %v722 = vunpack.c.h.b16 %v197
    %v723 = vunpack.c.l.b16 %v198
    %v724 = vunpack.c.h.b16 %v198
    %v725 = vunpack.c.l.b16 %v199
    %v726 = vunpack.c.h.b16 %v199
    %v727 = vunpack.c.l.b16 %v200
    %v728 = vunpack.c.h.b16 %v200
    %v729 = vunpack.c.l.b16 %v201
    %v730 = vunpack.c.h.b16 %v201
    %v731 = vunpack.c.l.b16 %v202
    %v732 = vunpack.c.h.b16 %v202
    %v733 = vunpack.c.l.b16 %v203
    %v734 = vunpack.c.h.b16 %v203
    %v735 = vunpack.c.l.b16 %v204
    %v736 = vunpack.c.h.b16 %v204
    %v737 = vunpack.c.l.b16 %v205
    %v738 = vunpack.c.h.b16 %v205
    %v739 = vunpack.c.l.b16 %v206
    %v740 = vunpack.c.h.b16 %v206
    %v741 = vunpack.c.l.b16 %v207
    %v742 = vunpack.c.h.b16 %v207
    %v743 = vunpack.c.l.b16 %v208
    %v744 = vunpack.c.h.b16 %v208
    %v745 = vunpack.c.l.b16 %v209
    %v746 = vunpack.c.h.b16 %v209
    %v747 = vunpack.c.l.b16 %v210
    %v748 = vunpack.c.h.b16 %v210
    %v749 = vunpack.c.l.b16 %v211
    %v750 = vunpack.c.h.b16 %v211
    %v751 = vunpack.c.l.b16 %v212
    %v752 = vunpack.c.h.b16 %v212
    %v753 = vunpack.c.l.b16 %v213
    %v754 = vunpack.c.h.b16 %v213
    %v755 = vunpack.c.l.b16 %v214
    %v756 = vunpack.c.h.b16 %v214
    %v757 = vunpack.c.l.b16 %v215
    %v758 = vunpack.c.h.b16 %v215
    %v759 = vunpack.c.l.b16 %v216
    %v760 = vunpack.c.h.b16 %v216
    %v761 = vunpack.c.l.b16 %v217
    %v762 = vunpack.c.h.b16 %v217
    %v763 = vunpack.c.l.b16 %v218
    %v764 = vunpack.c.h.b16 %v218
    %v765 = vunpack.c.l.b16 %v219
    %v766 = vunpack.c.h.b16 %v219
    %v767 = vunpack.c.l.b16 %v220
    %v768 = vunpack.c.h.b16 %v220
    %v769 = vunpack.c.l.b16 %v221
    %v770 = vunpack.c.h.b16 %v221
    %v771 = vunpack.c.l.b16 %v222
    %v772 = vunpack.c.h.b16 %v222
    %v773 = vunpack.c.l.b16 %v223
    %v774 = vunpack.c.h.b16 %v223
    %v775 = vunpack.c.l.b16 %v224
    %v776 = vunpack.c.h.b16 %v224
    %v777 = vunpack.c.l.b16 %v225
    %v778 = vunpack.c.h.b16 %v225
    %v779 = vunpack.c.l.b16 %v226
    %v780 = vunpack.c.h.b16 %v226
    %v781 = vunpack.c.l.b16 %v227
    %v782 = vunpack.c.h.b16 %v227
    %v783 = vunpack.c.l.b16 %v228
    %v784 = vunpack.c.h.b16 %v228
    %v785 = vunpack.c.l.b16 %v229
    %v786 = vunpack.c.h.b16 %v229
    %v787 = vunpack.c.l.b16 %v230
    %v788 = vunpack.c.h.b16 %v230
    %v789 = vunpack.c.l.b16 %v231
    %v790 = vunpack.c.h.b16 %v231
    %v791 = vunpack.c.l.b16 %v232
    %v792 = vunpack.c.h.b16 %v232
    %v793 = vunpack.c.l.b16 %v233
    %v794 = vunpack.c.h.b16 %v233
    %v795 = vunpack.c.l.b16 %v234
    %v796 = vunpack.c.h.b16 %v234
    %v797 = vunpack.c.l.b16 %v235
    %v798 = vunpack.c.h.b16 %v235
    %v799 = vunpack.c.l.b16 %v236
    %v800 = vunpack.c.h.b16 %v236
    %v801 = vunpack.c.l.b16 %v237
    %v802 = vunpack.c.h.b16 %v237
    %v803 = vunpack.c.l.b16 %v238
    %v804 = vunpack.c.h.b16 %v238
    %v805 = vunpack.c.l.b16 %v239
    %v806 = vunpack.c.h.b16 %v239
    %v807 = vunpack.c.l.b16 %v240
    %v808 = vunpack.c.h.b16 %v240
    %v809 = vunpack.c.l.b16 %v241
    %v810 = vunpack.c.h.b16 %v241
    %v811 = vunpack.c.l.b16 %v242
    %v812 = vunpack.c.h.b16 %v242
    %v813 = vunpack.c.l.b16 %v243
    %v814 = vunpack.c.h.b16 %v243
    %v815 = vunpack.c.l.b16 %v244
    %v816 = vunpack.c.h.b16 %v244
    %v817 = vunpack.c.l.b16 %v245
    %v818 = vunpack.c.h.b16 %v245
    %v819 = vunpack.c.l.b16 %v246
    %v820 = vunpack.c.h.b16 %v246
    %v821 = vunpack.c.l.b16 %v247
    %v822 = vunpack.c.h.b16 %v247
    %v823 = vunpack.c.l.b16 %v248
    %v824 = vunpack.c.h.b16 %v248
    %v825 = vunpack.c.l.b16 %v249
    %v826 = vunpack.c.h.b16 %v249
    %v827 = vunpack.c.l.b16 %v250
    %v828 = vunpack.c.h.b16 %v250
    %v829 = vunpack.c.l.b16 %v251
    %v830 = vunpack.c.h.b16 %v251
    %v831 = vunpack.c.l.b16 %v252
    %v832 = vunpack.c.h.b16 %v252
    %v833 = vunpack.c.l.b16 %v253
    %v834 = vunpack.c.h.b16 %v253
    %v835 = vunpack.c.l.b16 %v254
    %v836 = vunpack.c.h.b16 %v254
    %v837 = vunpack.c.l.b16 %v255
    %v838 = vunpack.c.h.b16 %v255
    %v839 = vunpack.c.l.b16 %v256
    %v840 = vunpack.c.h.b16 %v256
    %v841 = vunpack.c.l.b16 %v257
    %v842 = vunpack.c.h.b16 %v257
    %v843 = vunpack.c.l.b16 %v258
    %v844 = vunpack.c.h.b16 %v258
    %v845 = vunpack.c.l.b16 %v259
    %v846 = vunpack.c.h.b16 %v259
    %v847 = vunpack.c.l.b16 %v260
    %v848 = vunpack.c.h.b16 %v260
    %v849 = vunpack.c.l.b16 %v261
    %v850 = vunpack.c.h.b16 %v261
    %v851 = vunpack.c.l.b16 %v262
    %v852 = vunpack.c.h.b16 %v262
    %v853 = vunpack.c.l.b16 %v263
    %v854 = vunpack.c.h.b16 %v263
    %v855 = vunpack.c.l.b16 %v264
    %v856 = vunpack.c.h.b16 %v264
    %v857 = vunpack.c.l.b16 %v265
    %v858 = vunpack.c.h.b16 %v265
    %v859 = vunpack.c.l.b16 %v266
    %v860 = vunpack.c.h.b16 %v266
    %v861 = vunpack.c.l.b16 %v267
    %v862 = vunpack.c.h.b16 %v267
    %v863 = vunpack.c.l.b16 %v268
    %v864 = vunpack.c.h.b16 %v268
    %v865 = vunpack.c.l.b16 %v269
    %v866 = vunpack.c.h.b16 %v269
    %v867 = vunpack.c.l.b16 %v270
    %v868 = vunpack.c.h.b16 %v270
    %v869 = vpack.c.b16 %v481, %v477
    %v870 = vpack.c.b16 %v482, %v478
    %v871 = vpack.c.b16 %v483, %v479
    %v872 = vpack.c.b16 %v484, %v480
    %v873 = vpack.c.b16 %v489, %v485
    %v874 = vpack.c.b16 %v490, %v486
    %v875 = vpack.c.b16 %v491, %v487
    %v876 = vpack.c.b16 %v492, %v488
    %v877 = vpack.c.b16 %v497, %v493
    %v878 = vpack.c.b16 %v498, %v494
    %v879 = vpack.c.b16 %v499, %v495
    %v880 = vpack.c.b16 %v500, %v496
    %v881 = vpack.c.b16 %v505, %v501
    %v882 = vpack.c.b16 %v506, %v502
    %v883 = vpack.c.b16 %v507, %v503
    %v884 = vpack.c.b16 %v508, %v504
    %v885 = vpack.c.b16 %v513, %v509
    %v886 = vpack.c.b16 %v514, %v510
    %v887 = vpack.c.b16 %v515, %v511
    %v888 = vpack.c.b16 %v516, %v512
    %v889 = vpack.c.b16 %v521, %v517
    %v890 = vpack.c.b16 %v522, %v518
    %v891 = vpack.c.b16 %v523, %v519
    %v892 = vpack.c.b16 %v524, %v520
    %v893 = vpack.c.b16 %v529, %v525
    %v894 = vpack.c.b16 %v530, %v526
    %v895 = vpack.c.b16 %v531, %v527
    %v896 = vpack.c.b16 %v532, %v528
    %v897 = vpack.c.b16 %v537, %v533
    %v898 = vpack.c.b16 %v538, %v534
    %v899 = vpack.c.b16 %v539, %v535
    %v900 = vpack.c.b16 %v540, %v536
    %v901 = vpack.c.b16 %v545, %v541
    %v902 = vpack.c.b16 %v546, %v542
    %v903 = vpack.c.b16 %v547, %v543
    %v904 = vpack.c.b16 %v548, %v544
    %v905 = vpack.c.b16 %v553, %v549
    %v906 = vpack.c.b16 %v554, %v550
    %v907 = vpack.c.b16 %v555, %v551
    %v908 = vpack.c.b16 %v556, %v552
    %v909 = vpack.c.b16 %v561, %v557
    %v910 = vpack.c.b16 %v562, %v558
    %v911 = vpack.c.b16 %v563, %v559
    %v912 = vpack.c.b16 %v564, %v560
    %v913 = vpack.c.b16 %v569, %v565
    %v914 = vpack.c.b16 %v570, %v566
    %v915 = vpack.c.b16 %v571, %v567
    %v916 = vpack.c.b16 %v572, %v568
    %v917 = vpack.c.b16 %v577, %v573
    %v918 = vpack.c.b16 %v578, %v574
    %v919 = vpack.c.b16 %v579, %v575
    %v920 = vpack.c.b16 %v580, %v576
    %v921 = vpack.c.b16 %v585, %v581
    %v922 = vpack.c.b16 %v586, %v582
    %v923 = vpack.c.b16 %v587, %v583
    %v924 = vpack.c.b16 %v588, %v584
    %v925 = vpack.c.b16 %v593, %v589
    %v926 = vpack.c.b16 %v594, %v590
    %v927 = vpack.c.b16 %v595, %v591
    %v928 = vpack.c.b16 %v596, %v592
    %v929 = vpack.c.b16 %v601, %v597
    %v930 = vpack.c.b16 %v602, %v598
    %v931 = vpack.c.b16 %v603, %v599
    %v932 = vpack.c.b16 %v604, %v600
    %v933 = vpack.c.b16 %v609, %v605
    %v934 = vpack.c.b16 %v610, %v606
    %v935 = vpack.c.b16 %v611, %v607
    %v936 = vpack.c.b16 %v612, %v608
    %v937 = vpack.c.b16 %v617, %v613
    %v938 = vpack.c.b16 %v618, %v614
    %v939 = vpack.c.b16 %v619, %v615
    %v940 = vpack.c.b16 %v620, %v616
    %v941 = vpack.c.b16 %v625, %v621
    %v942 = vpack.c.b16 %v626, %v622
    %v943 = vpack.c.b16 %v627, %v623
    %v944 = vpack.c.b16 %v628, %v624
    %v945 = vpack.c.b16 %v633, %v629
    %v946 = vpack.c.b16 %v634, %v630
    %v947 = vpack.c.b16 %v635, %v631
    %v948 = vpack.c.b16 %v636, %v632
    %v949 = vpack.c.b16 %v641, %v637
    %v950 = vpack.c.b16 %v642, %v638
    %v951 = vpack.c.b16 %v643, %v639
    %v952 = vpack.c.b16 %v644, %v640
    %v953 = vpack.c.b16 %v649, %v645
    %v954 = vpack.c.b16 %v650, %v646
    %v955 = vpack.c.b16 %v651, %v647
    %v956 = vpack.c.b16 %v652, %v648
    %v957 = vpack.c.b16 %v657, %v653
    %v958 = vpack.c.b16 %v658, %v654
    %v959 = vpack.c.b16 %v659, %v655
    %v960 = vpack.c.b16 %v660, %v656
    %v961 = vpack.c.b16 %v665, %v661
    %v962 = vpack.c.b16 %v666, %v662
    %v963 = vpack.c.b16 %v667, %v663
    %v964 = vpack.c.b16 %v668, %v664
    %v965 = vpack.c.b16 %v673, %v669
    %v966 = vpack.c.b16 %v674, %v670
    %v967 = vpack.c.b16 %v675, %v671
    %v968 = vpack.c.b16 %v676, %v672
    %v969 = vpack.c.b16 %v681, %v677
    %v970 = vpack.c.b16 %v682, %v678
    %v971 = vpack.c.b16 %v683, %v679
    %v972 = vpack.c.b16 %v684, %v680
    %v973 = vpack.c.b16 %v689, %v685
    %v974 = vpack.c.b16 %v690, %v686
    %v975 = vpack.c.b16 %v691, %v687
    %v976 = vpack.c.b16 %v692, %v688
    %v977 = vpack.c.b16 %v697, %v693
    %v978 = vpack.c.b16 %v698, %v694
    %v979 = vpack.c.b16 %v699, %v695
    %v980 = vpack.c.b16 %v700, %v696
    %v981 = vpack.c.b16 %v705, %v701
    %v982 = vpack.c.b16 %v706, %v702
    %v983 = vpack.c.b16 %v707, %v703
    %v984 = vpack.c.b16 %v708, %v704
    %v985 = vpack.c.b16 %v713, %v709
    %v986 = vpack.c.b16 %v714, %v710
    %v987 = vpack.c.b16 %v715, %v711
    %v988 = vpack.c.b16 %v716, %v712
    %v989 = vpack.c.b16 %v721, %v717
    %v990 = vpack.c.b16 %v722, %v718
    %v991 = vpack.c.b16 %v723, %v719
    %v992 = vpack.c.b16 %v724, %v720
    %v993 = vpack.c.b16 %v729, %v725
    %v994 = vpack.c.b16 %v730, %v726
    %v995 = vpack.c.b16 %v731, %v727
    %v996 = vpack.c.b16 %v732, %v728
    %v997 = vpack.c.b16 %v737, %v733
    %v998 = vpack.c.b16 %v738, %v734
    %v999 = vpack.c.b16 %v739, %v735
    %v1000 = vpack.c.b16 %v740, %v736
    %v1001 = vpack.c.b16 %v745, %v741
    %v1002 = vpack.c.b16 %v746, %v742
    %v1003 = vpack.c.b16 %v747, %v743
    %v1004 = vpack.c.b16 %v748, %v744
    %v1005 = vpack.c.b16 %v753, %v749
    %v1006 = vpack.c.b16 %v754, %v750
    %v1007 = vpack.c.b16 %v755, %v751
    %v1008 = vpack.c.b16 %v756, %v752
    %v1009 = vpack.c.b16 %v761, %v757
    %v1010 = vpack.c.b16 %v762, %v758
    %v1011 = vpack.c.b16 %v763, %v759
    %v1012 = vpack.c.b16 %v764, %v760
    %v1013 = vpack.c.b16 %v769, %v765
    %v1014 = vpack.c.b16 %v770, %v766
    %v1015 = vpack.c.b16 %v771, %v767
    %v1016 = vpack.c.b16 %v772, %v768
    %v1017 = vpack.c.b16 %v777, %v773
    %v1018 = vpack.c.b16 %v778, %v774
    %v1019 = vpack.c.b16 %v779, %v775
    %v1020 = vpack.c.b16 %v780, %v776
    %v1021 = vpack.c.b16 %v785, %v781
    %v1022 = vpack.c.b16 %v786, %v782
    %v1023 = vpack.c.b16 %v787, %v783
    %v1024 = vpack.c.b16 %v788, %v784
    %v1025 = vpack.c.b16 %v793, %v789
    %v1026 = vpack.c.b16 %v794, %v790
    %v1027 = vpack.c.b16 %v795, %v791
    %v1028 = vpack.c.b16 %v796, %v792
    %v1029 = vpack.c.b16 %v801, %v797
    %v1030 = vpack.c.b16 %v802, %v798
    %v1031 = vpack.c.b16 %v803, %v799
    %v1032 = vpack.c.b16 %v804, %v800
    %v1033 = vpack.c.b16 %v809, %v805
    %v1034 = vpack.c.b16 %v810, %v806
    %v1035 = vpack.c.b16 %v811, %v807
    %v1036 = vpack.c.b16 %v812, %v808
    %v1037 = vpack.c.b16 %v817, %v813
    %v1038 = vpack.c.b16 %v818, %v814
    %v1039 = vpack.c.b16 %v819, %v815
    %v1040 = vpack.c.b16 %v820, %v816
    %v1041 = vpack.c.b16 %v825, %v821
    %v1042 = vpack.c.b16 %v826, %v822
    %v1043 = vpack.c.b16 %v827, %v823
    %v1044 = vpack.c.b16 %v828, %v824
    %v1045 = vpack.c.b16 %v833, %v829
    %v1046 = vpack.c.b16 %v834, %v830
    %v1047 = vpack.c.b16 %v835, %v831
    %v1048 = vpack.c.b16 %v836, %v832
    %v1049 = vpack.c.b16 %v841, %v837
    %v1050 = vpack.c.b16 %v842, %v838
    %v1051 = vpack.c.b16 %v843, %v839
    %v1052 = vpack.c.b16 %v844, %v840
    %v1053 = vpack.c.b16 %v849, %v845
    %v1054 = vpack.c.b16 %v850, %v846
    %v1055 = vpack.c.b16 %v851, %v847
    %v1056 = vpack.c.b16 %v852, %v848
    %v1057 = vpack.c.b16 %v857, %v853
    %v1058 = vpack.c.b16 %v858, %v854
    %v1059 = vpack.c.b16 %v859, %v855
    %v1060 = vpack.c.b16 %v860, %v856
    %v1061 = vpack.c.b16 %v865, %v861
    %v1062 = vpack.c.b16 %v866, %v862
    %v1063 = vpack.c.b16 %v867, %v863
    %v1064 = vpack.c.b16 %v868, %v864
    %vm1261 = vcmask 130048
    %v1263 = vsel %vm1261, %v74, 0
    %1265 = vmatpush.bf16.msra.mxu0 %v897
    %1266 = vmatpush.bf16.msra.mxu0 %v893
    %1267 = vmatpush.bf16.msra.mxu0 %v889
    %1268 = vmatpush.bf16.msra.mxu0 %v885
    %1269 = vmatpush.bf16.msra.mxu0 %v881
    %1270 = vmatpush.bf16.msra.mxu0 %v877
    %1271 = vmatpush.bf16.msra.mxu0 %v873
    %1272 = vmatpush.bf16.msra.mxu0 %v869
    %1273 = vmatmul.bf16.gmra.mxu0 %v68
    %v1274 = vpop.f32.mrf.mxu0
    %v1275 = vadd.f32 %v273, %v1274
    %v1276 = vpop.f32.mrf.mxu0
    %1277 = vdwg.mxu0
    %1278 = vmatpush.bf16.msra.mxu0 %v929
    %1279 = vmatpush.bf16.msra.mxu0 %v925
    %1280 = vmatpush.bf16.msra.mxu0 %v921
    %1281 = vmatpush.bf16.msra.mxu0 %v917
    %1282 = vmatpush.bf16.msra.mxu0 %v913
    %1283 = vmatpush.bf16.msra.mxu0 %v909
    %1284 = vmatpush.bf16.msra.mxu0 %v905
    %1285 = vmatpush.bf16.msra.mxu0 %v901
    %1286 = vmatmul.bf16.gmra.mxu0 %v69
    %v1287 = vpop.f32.mrf.mxu0
    %v1288 = vadd.f32 %v1275, %v1287
    %v1289 = vpop.f32.mrf.mxu0
    %1290 = vdwg.mxu0
    %1291 = vmatpush.bf16.msra.mxu0 %v961
    %1292 = vmatpush.bf16.msra.mxu0 %v957
    %1293 = vmatpush.bf16.msra.mxu0 %v953
    %1294 = vmatpush.bf16.msra.mxu0 %v949
    %1295 = vmatpush.bf16.msra.mxu0 %v945
    %1296 = vmatpush.bf16.msra.mxu0 %v941
    %1297 = vmatpush.bf16.msra.mxu0 %v937
    %1298 = vmatpush.bf16.msra.mxu0 %v933
    %1299 = vmatmul.bf16.gmra.mxu0 %v70
    %v1300 = vpop.f32.mrf.mxu0
    %v1301 = vadd.f32 %v1288, %v1300
    %v1302 = vpop.f32.mrf.mxu0
    %1303 = vdwg.mxu0
    %1304 = vmatpush.bf16.msra.mxu0 %v993
    %1305 = vmatpush.bf16.msra.mxu0 %v989
    %1306 = vmatpush.bf16.msra.mxu0 %v985
    %1307 = vmatpush.bf16.msra.mxu0 %v981
    %1308 = vmatpush.bf16.msra.mxu0 %v977
    %1309 = vmatpush.bf16.msra.mxu0 %v973
    %1310 = vmatpush.bf16.msra.mxu0 %v969
    %1311 = vmatpush.bf16.msra.mxu0 %v965
    %1312 = vmatmul.bf16.gmra.mxu0 %v71
    %v1313 = vpop.f32.mrf.mxu0
    %v1314 = vadd.f32 %v1301, %v1313
    %v1315 = vpop.f32.mrf.mxu0
    %1316 = vdwg.mxu0
    %1317 = vmatpush.bf16.msra.mxu0 %v1025
    %1318 = vmatpush.bf16.msra.mxu0 %v1021
    %1319 = vmatpush.bf16.msra.mxu0 %v1017
    %1320 = vmatpush.bf16.msra.mxu0 %v1013
    %1321 = vmatpush.bf16.msra.mxu0 %v1009
    %1322 = vmatpush.bf16.msra.mxu0 %v1005
    %1323 = vmatpush.bf16.msra.mxu0 %v1001
    %1324 = vmatpush.bf16.msra.mxu0 %v997
    %1325 = vmatmul.bf16.gmra.mxu0 %v72
    %v1326 = vpop.f32.mrf.mxu0
    %v1327 = vadd.f32 %v1314, %v1326
    %v1328 = vpop.f32.mrf.mxu0
    %1329 = vdwg.mxu0
    %1330 = vmatpush.bf16.msra.mxu0 %v1057
    %1331 = vmatpush.bf16.msra.mxu0 %v1053
    %1332 = vmatpush.bf16.msra.mxu0 %v1049
    %1333 = vmatpush.bf16.msra.mxu0 %v1045
    %1334 = vmatpush.bf16.msra.mxu0 %v1041
    %1335 = vmatpush.bf16.msra.mxu0 %v1037
    %1336 = vmatpush.bf16.msra.mxu0 %v1033
    %1337 = vmatpush.bf16.msra.mxu0 %v1029
    %1338 = vmatmul.bf16.gmra.mxu0 %v73
    %v1339 = vpop.f32.mrf.mxu0
    %v1340 = vadd.f32 %v1327, %v1339
    %v1341 = vpop.f32.mrf.mxu0
    %1342 = vdwg.mxu0
    %1343 = vmatpush.bf16.msra.mxu0 0
    %1344 = vmatpush.bf16.msra.mxu0 0
    %1345 = vmatpush.bf16.msra.mxu0 0
    %1346 = vmatpush.bf16.msra.mxu0 0
    %1347 = vmatpush.bf16.msra.mxu0 0
    %1348 = vmatpush.bf16.msra.mxu0 0
    %1349 = vmatpush.bf16.msra.mxu0 0
    %1350 = vmatpush.bf16.msra.mxu0 %v1061
    %1351 = vmatmul.bf16.gmra.mxu0 %v1263
    %v1352 = vpop.f32.mrf.mxu0
    %v1353 = vadd.f32 %v1340, %v1352
    %v1354 = vpop.f32.mrf.mxu0
    %1355 = vdwg.mxu0
    %1356 = vmatpush.bf16.msra.mxu0 %v898
    %1357 = vmatpush.bf16.msra.mxu0 %v894
    %1358 = vmatpush.bf16.msra.mxu0 %v890
    %1359 = vmatpush.bf16.msra.mxu0 %v886
    %1360 = vmatpush.bf16.msra.mxu0 %v882
    %1361 = vmatpush.bf16.msra.mxu0 %v878
    %1362 = vmatpush.bf16.msra.mxu0 %v874
    %1363 = vmatpush.bf16.msra.mxu0 %v870
    %1364 = vmatmul.bf16.gmra.mxu0 %v68
    %v1365 = vpop.f32.mrf.mxu0
    %v1366 = vadd.f32 %v274, %v1365
    %v1367 = vpop.f32.mrf.mxu0
    %1368 = vdwg.mxu0
    %1369 = vmatpush.bf16.msra.mxu0 %v930
    %1370 = vmatpush.bf16.msra.mxu0 %v926
    %1371 = vmatpush.bf16.msra.mxu0 %v922
    %1372 = vmatpush.bf16.msra.mxu0 %v918
    %1373 = vmatpush.bf16.msra.mxu0 %v914
    %1374 = vmatpush.bf16.msra.mxu0 %v910
    %1375 = vmatpush.bf16.msra.mxu0 %v906
    %1376 = vmatpush.bf16.msra.mxu0 %v902
    %1377 = vmatmul.bf16.gmra.mxu0 %v69
    %v1378 = vpop.f32.mrf.mxu0
    %v1379 = vadd.f32 %v1366, %v1378
    %v1380 = vpop.f32.mrf.mxu0
    %1381 = vdwg.mxu0
    %1382 = vmatpush.bf16.msra.mxu0 %v962
    %1383 = vmatpush.bf16.msra.mxu0 %v958
    %1384 = vmatpush.bf16.msra.mxu0 %v954
    %1385 = vmatpush.bf16.msra.mxu0 %v950
    %1386 = vmatpush.bf16.msra.mxu0 %v946
    %1387 = vmatpush.bf16.msra.mxu0 %v942
    %1388 = vmatpush.bf16.msra.mxu0 %v938
    %1389 = vmatpush.bf16.msra.mxu0 %v934
    %1390 = vmatmul.bf16.gmra.mxu0 %v70
    %v1391 = vpop.f32.mrf.mxu0
    %v1392 = vadd.f32 %v1379, %v1391
    %v1393 = vpop.f32.mrf.mxu0
    %1394 = vdwg.mxu0
    %1395 = vmatpush.bf16.msra.mxu0 %v994
    %1396 = vmatpush.bf16.msra.mxu0 %v990
    %1397 = vmatpush.bf16.msra.mxu0 %v986
    %1398 = vmatpush.bf16.msra.mxu0 %v982
    %1399 = vmatpush.bf16.msra.mxu0 %v978
    %1400 = vmatpush.bf16.msra.mxu0 %v974
    %1401 = vmatpush.bf16.msra.mxu0 %v970
    %1402 = vmatpush.bf16.msra.mxu0 %v966
    %1403 = vmatmul.bf16.gmra.mxu0 %v71
    %v1404 = vpop.f32.mrf.mxu0
    %v1405 = vadd.f32 %v1392, %v1404
    %v1406 = vpop.f32.mrf.mxu0
    %1407 = vdwg.mxu0
    %1408 = vmatpush.bf16.msra.mxu0 %v1026
    %1409 = vmatpush.bf16.msra.mxu0 %v1022
    %1410 = vmatpush.bf16.msra.mxu0 %v1018
    %1411 = vmatpush.bf16.msra.mxu0 %v1014
    %1412 = vmatpush.bf16.msra.mxu0 %v1010
    %1413 = vmatpush.bf16.msra.mxu0 %v1006
    %1414 = vmatpush.bf16.msra.mxu0 %v1002
    %1415 = vmatpush.bf16.msra.mxu0 %v998
    %1416 = vmatmul.bf16.gmra.mxu0 %v72
    %v1417 = vpop.f32.mrf.mxu0
    %v1418 = vadd.f32 %v1405, %v1417
    %v1419 = vpop.f32.mrf.mxu0
    %1420 = vdwg.mxu0
    %1421 = vmatpush.bf16.msra.mxu0 %v1058
    %1422 = vmatpush.bf16.msra.mxu0 %v1054
    %1423 = vmatpush.bf16.msra.mxu0 %v1050
    %1424 = vmatpush.bf16.msra.mxu0 %v1046
    %1425 = vmatpush.bf16.msra.mxu0 %v1042
    %1426 = vmatpush.bf16.msra.mxu0 %v1038
    %1427 = vmatpush.bf16.msra.mxu0 %v1034
    %1428 = vmatpush.bf16.msra.mxu0 %v1030
    %1429 = vmatmul.bf16.gmra.mxu0 %v73
    %v1430 = vpop.f32.mrf.mxu0
    %v1431 = vadd.f32 %v1418, %v1430
    %v1432 = vpop.f32.mrf.mxu0
    %1433 = vdwg.mxu0
    %1434 = vmatpush.bf16.msra.mxu0 0
    %1435 = vmatpush.bf16.msra.mxu0 0
    %1436 = vmatpush.bf16.msra.mxu0 0
    %1437 = vmatpush.bf16.msra.mxu0 0
    %1438 = vmatpush.bf16.msra.mxu0 0
    %1439 = vmatpush.bf16.msra.mxu0 0
    %1440 = vmatpush.bf16.msra.mxu0 0
    %1441 = vmatpush.bf16.msra.mxu0 %v1062
    %1442 = vmatmul.bf16.gmra.mxu0 %v1263
    %v1443 = vpop.f32.mrf.mxu0
    %v1444 = vadd.f32 %v1431, %v1443
    %v1445 = vpop.f32.mrf.mxu0
    %1446 = vdwg.mxu0
    %1447 = vmatpush.bf16.msra.mxu0 %v899
    %1448 = vmatpush.bf16.msra.mxu0 %v895
    %1449 = vmatpush.bf16.msra.mxu0 %v891
    %1450 = vmatpush.bf16.msra.mxu0 %v887
    %1451 = vmatpush.bf16.msra.mxu0 %v883
    %1452 = vmatpush.bf16.msra.mxu0 %v879
    %1453 = vmatpush.bf16.msra.mxu0 %v875
    %1454 = vmatpush.bf16.msra.mxu0 %v871
    %1455 = vmatmul.bf16.gmra.mxu0 %v68
    %v1456 = vpop.f32.mrf.mxu0
    %v1457 = vadd.f32 %v275, %v1456
    %v1458 = vpop.f32.mrf.mxu0
    %1459 = vdwg.mxu0
    %1460 = vmatpush.bf16.msra.mxu0 %v931
    %1461 = vmatpush.bf16.msra.mxu0 %v927
    %1462 = vmatpush.bf16.msra.mxu0 %v923
    %1463 = vmatpush.bf16.msra.mxu0 %v919
    %1464 = vmatpush.bf16.msra.mxu0 %v915
    %1465 = vmatpush.bf16.msra.mxu0 %v911
    %1466 = vmatpush.bf16.msra.mxu0 %v907
    %1467 = vmatpush.bf16.msra.mxu0 %v903
    %1468 = vmatmul.bf16.gmra.mxu0 %v69
    %v1469 = vpop.f32.mrf.mxu0
    %v1470 = vadd.f32 %v1457, %v1469
    %v1471 = vpop.f32.mrf.mxu0
    %1472 = vdwg.mxu0
    %1473 = vmatpush.bf16.msra.mxu0 %v963
    %1474 = vmatpush.bf16.msra.mxu0 %v959
    %1475 = vmatpush.bf16.msra.mxu0 %v955
    %1476 = vmatpush.bf16.msra.mxu0 %v951
    %1477 = vmatpush.bf16.msra.mxu0 %v947
    %1478 = vmatpush.bf16.msra.mxu0 %v943
    %1479 = vmatpush.bf16.msra.mxu0 %v939
    %1480 = vmatpush.bf16.msra.mxu0 %v935
    %1481 = vmatmul.bf16.gmra.mxu0 %v70
    %v1482 = vpop.f32.mrf.mxu0
    %v1483 = vadd.f32 %v1470, %v1482
    %v1484 = vpop.f32.mrf.mxu0
    %1485 = vdwg.mxu0
    %1486 = vmatpush.bf16.msra.mxu0 %v995
    %1487 = vmatpush.bf16.msra.mxu0 %v991
    %1488 = vmatpush.bf16.msra.mxu0 %v987
    %1489 = vmatpush.bf16.msra.mxu0 %v983
    %1490 = vmatpush.bf16.msra.mxu0 %v979
    %1491 = vmatpush.bf16.msra.mxu0 %v975
    %1492 = vmatpush.bf16.msra.mxu0 %v971
    %1493 = vmatpush.bf16.msra.mxu0 %v967
    %1494 = vmatmul.bf16.gmra.mxu0 %v71
    %v1495 = vpop.f32.mrf.mxu0
    %v1496 = vadd.f32 %v1483, %v1495
    %v1497 = vpop.f32.mrf.mxu0
    %1498 = vdwg.mxu0
    %1499 = vmatpush.bf16.msra.mxu0 %v1027
    %1500 = vmatpush.bf16.msra.mxu0 %v1023
    %1501 = vmatpush.bf16.msra.mxu0 %v1019
    %1502 = vmatpush.bf16.msra.mxu0 %v1015
    %1503 = vmatpush.bf16.msra.mxu0 %v1011
    %1504 = vmatpush.bf16.msra.mxu0 %v1007
    %1505 = vmatpush.bf16.msra.mxu0 %v1003
    %1506 = vmatpush.bf16.msra.mxu0 %v999
    %1507 = vmatmul.bf16.gmra.mxu0 %v72
    %v1508 = vpop.f32.mrf.mxu0
    %v1509 = vadd.f32 %v1496, %v1508
    %v1510 = vpop.f32.mrf.mxu0
    %1511 = vdwg.mxu0
    %1512 = vmatpush.bf16.msra.mxu0 %v1059
    %1513 = vmatpush.bf16.msra.mxu0 %v1055
    %1514 = vmatpush.bf16.msra.mxu0 %v1051
    %1515 = vmatpush.bf16.msra.mxu0 %v1047
    %1516 = vmatpush.bf16.msra.mxu0 %v1043
    %1517 = vmatpush.bf16.msra.mxu0 %v1039
    %1518 = vmatpush.bf16.msra.mxu0 %v1035
    %1519 = vmatpush.bf16.msra.mxu0 %v1031
    %1520 = vmatmul.bf16.gmra.mxu0 %v73
    %v1521 = vpop.f32.mrf.mxu0
    %v1522 = vadd.f32 %v1509, %v1521
    %v1523 = vpop.f32.mrf.mxu0
    %1524 = vdwg.mxu0
    %1525 = vmatpush.bf16.msra.mxu0 0
    %1526 = vmatpush.bf16.msra.mxu0 0
    %1527 = vmatpush.bf16.msra.mxu0 0
    %1528 = vmatpush.bf16.msra.mxu0 0
    %1529 = vmatpush.bf16.msra.mxu0 0
    %1530 = vmatpush.bf16.msra.mxu0 0
    %1531 = vmatpush.bf16.msra.mxu0 0
    %1532 = vmatpush.bf16.msra.mxu0 %v1063
    %1533 = vmatmul.bf16.gmra.mxu0 %v1263
    %v1534 = vpop.f32.mrf.mxu0
    %v1535 = vadd.f32 %v1522, %v1534
    %v1536 = vpop.f32.mrf.mxu0
    %1537 = vdwg.mxu0
    %1538 = vmatpush.bf16.msra.mxu0 %v900
    %1539 = vmatpush.bf16.msra.mxu0 %v896
    %1540 = vmatpush.bf16.msra.mxu0 %v892
    %1541 = vmatpush.bf16.msra.mxu0 %v888
    %1542 = vmatpush.bf16.msra.mxu0 %v884
    %1543 = vmatpush.bf16.msra.mxu0 %v880
    %1544 = vmatpush.bf16.msra.mxu0 %v876
    %1545 = vmatpush.bf16.msra.mxu0 %v872
    %1546 = vmatmul.bf16.gmra.mxu0 %v68
    %v1547 = vpop.f32.mrf.mxu0
    %v1548 = vadd.f32 %v276, %v1547
    %v1549 = vpop.f32.mrf.mxu0
    %1550 = vdwg.mxu0
    %1551 = vmatpush.bf16.msra.mxu0 %v932
    %1552 = vmatpush.bf16.msra.mxu0 %v928
    %1553 = vmatpush.bf16.msra.mxu0 %v924
    %1554 = vmatpush.bf16.msra.mxu0 %v920
    %1555 = vmatpush.bf16.msra.mxu0 %v916
    %1556 = vmatpush.bf16.msra.mxu0 %v912
    %1557 = vmatpush.bf16.msra.mxu0 %v908
    %1558 = vmatpush.bf16.msra.mxu0 %v904
    %1559 = vmatmul.bf16.gmra.mxu0 %v69
    %v1560 = vpop.f32.mrf.mxu0
    %v1561 = vadd.f32 %v1548, %v1560
    %v1562 = vpop.f32.mrf.mxu0
    %1563 = vdwg.mxu0
    %1564 = vmatpush.bf16.msra.mxu0 %v964
    %1565 = vmatpush.bf16.msra.mxu0 %v960
    %1566 = vmatpush.bf16.msra.mxu0 %v956
    %1567 = vmatpush.bf16.msra.mxu0 %v952
    %1568 = vmatpush.bf16.msra.mxu0 %v948
    %1569 = vmatpush.bf16.msra.mxu0 %v944
    %1570 = vmatpush.bf16.msra.mxu0 %v940
    %1571 = vmatpush.bf16.msra.mxu0 %v936
    %1572 = vmatmul.bf16.gmra.mxu0 %v70
    %v1573 = vpop.f32.mrf.mxu0
    %v1574 = vadd.f32 %v1561, %v1573
    %v1575 = vpop.f32.mrf.mxu0
    %1576 = vdwg.mxu0
    %1577 = vmatpush.bf16.msra.mxu0 %v996
    %1578 = vmatpush.bf16.msra.mxu0 %v992
    %1579 = vmatpush.bf16.msra.mxu0 %v988
    %1580 = vmatpush.bf16.msra.mxu0 %v984
    %1581 = vmatpush.bf16.msra.mxu0 %v980
    %1582 = vmatpush.bf16.msra.mxu0 %v976
    %1583 = vmatpush.bf16.msra.mxu0 %v972
    %1584 = vmatpush.bf16.msra.mxu0 %v968
    %1585 = vmatmul.bf16.gmra.mxu0 %v71
    %v1586 = vpop.f32.mrf.mxu0
    %v1587 = vadd.f32 %v1574, %v1586
    %v1588 = vpop.f32.mrf.mxu0
    %1589 = vdwg.mxu0
    %1590 = vmatpush.bf16.msra.mxu0 %v1028
    %1591 = vmatpush.bf16.msra.mxu0 %v1024
    %1592 = vmatpush.bf16.msra.mxu0 %v1020
    %1593 = vmatpush.bf16.msra.mxu0 %v1016
    %1594 = vmatpush.bf16.msra.mxu0 %v1012
    %1595 = vmatpush.bf16.msra.mxu0 %v1008
    %1596 = vmatpush.bf16.msra.mxu0 %v1004
    %1597 = vmatpush.bf16.msra.mxu0 %v1000
    %1598 = vmatmul.bf16.gmra.mxu0 %v72
    %v1599 = vpop.f32.mrf.mxu0
    %v1600 = vadd.f32 %v1587, %v1599
    %v1601 = vpop.f32.mrf.mxu0
    %1602 = vdwg.mxu0
    %1603 = vmatpush.bf16.msra.mxu0 %v1060
    %1604 = vmatpush.bf16.msra.mxu0 %v1056
    %1605 = vmatpush.bf16.msra.mxu0 %v1052
    %1606 = vmatpush.bf16.msra.mxu0 %v1048
    %1607 = vmatpush.bf16.msra.mxu0 %v1044
    %1608 = vmatpush.bf16.msra.mxu0 %v1040
    %1609 = vmatpush.bf16.msra.mxu0 %v1036
    %1610 = vmatpush.bf16.msra.mxu0 %v1032
    %1611 = vmatmul.bf16.gmra.mxu0 %v73
    %v1612 = vpop.f32.mrf.mxu0
    %v1613 = vadd.f32 %v1600, %v1612
    %v1614 = vpop.f32.mrf.mxu0
    %1615 = vdwg.mxu0
    %1616 = vmatpush.bf16.msra.mxu0 0
    %1617 = vmatpush.bf16.msra.mxu0 0
    %1618 = vmatpush.bf16.msra.mxu0 0
    %1619 = vmatpush.bf16.msra.mxu0 0
    %1620 = vmatpush.bf16.msra.mxu0 0
    %1621 = vmatpush.bf16.msra.mxu0 0
    %1622 = vmatpush.bf16.msra.mxu0 0
    %1623 = vmatpush.bf16.msra.mxu0 %v1064
    %1624 = vmatmul.bf16.gmra.mxu0 %v1263
    %v1625 = vpop.f32.mrf.mxu0
    %v1626 = vadd.f32 %v1613, %v1625
    %v1627 = vpop.f32.mrf.mxu0
    %1628 = vdwg.mxu0
    %vm1629 = vcmp.gt.f32.partialorder %v1353, 0.0
    %vm1630 = vcmp.gt.f32.partialorder %v1444, 0.0
    %vm1631 = vcmp.gt.f32.partialorder %v1535, 0.0
    %vm1632 = vcmp.gt.f32.partialorder %v1626, 0.0
    %v1633 = vmul.f32 %v1353, 0.2
    %v1634 = vmul.f32 %v1444, 0.2
    %v1635 = vmul.f32 %v1535, 0.2
    %v1636 = vmul.f32 %v1626, 0.2
    %v1637 = vsel %vm1629, %v1353, %v1633
    %v1638 = vsel %vm1630, %v1444, %v1634
    %v1639 = vsel %vm1631, %v1535, %v1635
    %v1640 = vsel %vm1632, %v1626, %v1636
    %v1641 = vpack.c.bf16 %v1637, %v1637
    %v1642 = vpack.c.bf16 %v1638, %v1638
    %v1643 = vpack.c.bf16 %v1639, %v1639
    %v1644 = vpack.c.bf16 %v1640, %v1640
    %v1645 = vld [vmem:[#allocation5] sm:$0xff]
    %v1646 = vld [vmem:[#allocation5 + $0x8] sm:$0xff]
    %v1647 = vld [vmem:[#allocation5 + $0x10] sm:$0xff]
    %v1648 = vld [vmem:[#allocation5 + $0x18] sm:$0xff]
    %v1649 = vld [vmem:[#allocation5 + $0x20] sm:$0xff]
    %v1650 = vld [vmem:[#allocation5 + $0x28] sm:$0xff]
    %v1651 = vld [vmem:[#allocation5 + $0x30] sm:$0xff]
    %v1652 = vld [vmem:[#allocation5 + $0x38] sm:$0xff]
    %v1653 = vld [vmem:[#allocation5 + $0x40] sm:$0xff]
    %v1654 = vld [vmem:[#allocation5 + $0x48] sm:$0xff]
    %v1655 = vld [vmem:[#allocation5 + $0x50] sm:$0xff]
    %v1656 = vld [vmem:[#allocation5 + $0x58] sm:$0xff]
    %v1657 = vld [vmem:[#allocation5 + $0x60] sm:$0xff]
    %v1658 = vld [vmem:[#allocation5 + $0x68] sm:$0xff]
    %v1659 = vld [vmem:[#allocation5 + $0x70] sm:$0xff]
    %v1660 = vld [vmem:[#allocation5 + $0x78] sm:$0xff]
    %v1661 = vld [vmem:[#allocation5 + $0x80] sm:$0xff]
    %v1662 = vld [vmem:[#allocation5 + $0x88] sm:$0xff]
    %v1663 = vld [vmem:[#allocation5 + $0x90] sm:$0xff]
    %v1664 = vld [vmem:[#allocation5 + $0x98] sm:$0xff]
    %v1665 = vld [vmem:[#allocation5 + $0xa0] sm:$0xff]
    %v1666 = vld [vmem:[#allocation5 + $0xa8] sm:$0xff]
    %v1667 = vld [vmem:[#allocation5 + $0xb0] sm:$0xff]
    %v1668 = vld [vmem:[#allocation5 + $0xb8] sm:$0xff]
    %v1669 = vld [vmem:[#allocation5 + $0xc0] sm:$0xff]
    %v1670 = vld [vmem:[#allocation5 + $0xc8] sm:$0xff]
    %v1671 = vld [vmem:[#allocation5 + $0xd0] sm:$0xff]
    %v1672 = vld [vmem:[#allocation5 + $0xd8] sm:$0xff]
    %v1673 = vld [vmem:[#allocation5 + $0xe0] sm:$0xff]
    %v1674 = vld [vmem:[#allocation5 + $0xe8] sm:$0xff]
    %v1675 = vld [vmem:[#allocation5 + $0xf0] sm:$0xff]
    %v1676 = vld [vmem:[#allocation5 + $0xf8] sm:$0xff]
    %v1677 = vld [vmem:[#allocation5 + $0x100] sm:$0xff]
    %v1678 = vld [vmem:[#allocation5 + $0x108] sm:$0xff]
    %v1679 = vld [vmem:[#allocation5 + $0x110] sm:$0xff]
    %v1680 = vld [vmem:[#allocation5 + $0x118] sm:$0xff]
    %v1681 = vld [vmem:[#allocation5 + $0x120] sm:$0xff]
    %v1682 = vld [vmem:[#allocation5 + $0x128] sm:$0xff]
    %v1683 = vld [vmem:[#allocation5 + $0x130] sm:$0xff]
    %v1684 = vld [vmem:[#allocation5 + $0x138] sm:$0xff]
    %v1685 = vld [vmem:[#allocation5 + $0x140] sm:$0xff]
    %v1686 = vld [vmem:[#allocation5 + $0x148] sm:$0xff]
    %v1687 = vld [vmem:[#allocation5 + $0x150] sm:$0xff]
    %v1688 = vld [vmem:[#allocation5 + $0x158] sm:$0xff]
    %v1689 = vld [vmem:[#allocation5 + $0x160] sm:$0xff]
    %v1690 = vld [vmem:[#allocation5 + $0x168] sm:$0xff]
    %v1691 = vld [vmem:[#allocation5 + $0x170] sm:$0xff]
    %v1692 = vld [vmem:[#allocation5 + $0x178] sm:$0xff]
    %v1693 = vld [vmem:[#allocation5 + $0x180] sm:$0xff]
    %v1694 = vld [vmem:[#allocation5 + $0x188] sm:$0xff]
    %v1695 = vld [vmem:[#allocation5 + $0x190] sm:$0xff]
    %v1696 = vld [vmem:[#allocation5 + $0x198] sm:$0xff]
    %v1697 = vld [vmem:[#allocation5 + $0x1a0] sm:$0xff]
    %v1698 = vld [vmem:[#allocation5 + $0x1a8] sm:$0xff]
    %v1699 = vld [vmem:[#allocation5 + $0x1b0] sm:$0xff]
    %v1700 = vld [vmem:[#allocation5 + $0x1b8] sm:$0xff]
    %v1701 = vld [vmem:[#allocation5 + $0x1c0] sm:$0xff]
    %v1702 = vld [vmem:[#allocation5 + $0x1c8] sm:$0xff]
    %v1703 = vld [vmem:[#allocation5 + $0x1d0] sm:$0xff]
    %v1704 = vld [vmem:[#allocation5 + $0x1d8] sm:$0xff]
    %v1705 = vld [vmem:[#allocation5 + $0x1e0] sm:$0xff]
    %v1706 = vld [vmem:[#allocation5 + $0x1e8] sm:$0xff]
    %v1707 = vld [vmem:[#allocation5 + $0x1f0] sm:$0xff]
    %v1708 = vld [vmem:[#allocation5 + $0x1f8] sm:$0xff]
    %v1709 = vld [vmem:[%s4] sm:$0x3]
    %v1711 = vperm.slane %v1709, 0
    %v1712 = vperm.slane %v1709, 1
    %v1779 = vunpack.c.l.b16 %v1645
    %v1780 = vunpack.c.h.b16 %v1645
    %v1781 = vunpack.c.l.b16 %v1646
    %v1782 = vunpack.c.h.b16 %v1646
    %v1783 = vunpack.c.l.b16 %v1647
    %v1784 = vunpack.c.h.b16 %v1647
    %v1785 = vunpack.c.l.b16 %v1648
    %v1786 = vunpack.c.h.b16 %v1648
    %v1787 = vunpack.c.l.b16 %v1649
    %v1788 = vunpack.c.h.b16 %v1649
    %v1789 = vunpack.c.l.b16 %v1650
    %v1790 = vunpack.c.h.b16 %v1650
    %v1791 = vunpack.c.l.b16 %v1651
    %v1792 = vunpack.c.h.b16 %v1651
    %v1793 = vunpack.c.l.b16 %v1652
    %v1794 = vunpack.c.h.b16 %v1652
    %v1795 = vunpack.c.l.b16 %v1653
    %v1796 = vunpack.c.h.b16 %v1653
    %v1797 = vunpack.c.l.b16 %v1654
    %v1798 = vunpack.c.h.b16 %v1654
    %v1799 = vunpack.c.l.b16 %v1655
    %v1800 = vunpack.c.h.b16 %v1655
    %v1801 = vunpack.c.l.b16 %v1656
    %v1802 = vunpack.c.h.b16 %v1656
    %v1803 = vunpack.c.l.b16 %v1657
    %v1804 = vunpack.c.h.b16 %v1657
    %v1805 = vunpack.c.l.b16 %v1658
    %v1806 = vunpack.c.h.b16 %v1658
    %v1807 = vunpack.c.l.b16 %v1659
    %v1808 = vunpack.c.h.b16 %v1659
    %v1809 = vunpack.c.l.b16 %v1660
    %v1810 = vunpack.c.h.b16 %v1660
    %v1811 = vunpack.c.l.b16 %v1661
    %v1812 = vunpack.c.h.b16 %v1661
    %v1813 = vunpack.c.l.b16 %v1662
    %v1814 = vunpack.c.h.b16 %v1662
    %v1815 = vunpack.c.l.b16 %v1663
    %v1816 = vunpack.c.h.b16 %v1663
    %v1817 = vunpack.c.l.b16 %v1664
    %v1818 = vunpack.c.h.b16 %v1664
    %v1819 = vunpack.c.l.b16 %v1665
    %v1820 = vunpack.c.h.b16 %v1665
    %v1821 = vunpack.c.l.b16 %v1666
    %v1822 = vunpack.c.h.b16 %v1666
    %v1823 = vunpack.c.l.b16 %v1667
    %v1824 = vunpack.c.h.b16 %v1667
    %v1825 = vunpack.c.l.b16 %v1668
    %v1826 = vunpack.c.h.b16 %v1668
    %v1827 = vunpack.c.l.b16 %v1669
    %v1828 = vunpack.c.h.b16 %v1669
    %v1829 = vunpack.c.l.b16 %v1670
    %v1830 = vunpack.c.h.b16 %v1670
    %v1831 = vunpack.c.l.b16 %v1671
    %v1832 = vunpack.c.h.b16 %v1671
    %v1833 = vunpack.c.l.b16 %v1672
    %v1834 = vunpack.c.h.b16 %v1672
    %v1835 = vunpack.c.l.b16 %v1673
    %v1836 = vunpack.c.h.b16 %v1673
    %v1837 = vunpack.c.l.b16 %v1674
    %v1838 = vunpack.c.h.b16 %v1674
    %v1839 = vunpack.c.l.b16 %v1675
    %v1840 = vunpack.c.h.b16 %v1675
    %v1841 = vunpack.c.l.b16 %v1676
    %v1842 = vunpack.c.h.b16 %v1676
    %v1843 = vunpack.c.l.b16 %v1677
    %v1844 = vunpack.c.h.b16 %v1677
    %v1845 = vunpack.c.l.b16 %v1678
    %v1846 = vunpack.c.h.b16 %v1678
    %v1847 = vunpack.c.l.b16 %v1679
    %v1848 = vunpack.c.h.b16 %v1679
    %v1849 = vunpack.c.l.b16 %v1680
    %v1850 = vunpack.c.h.b16 %v1680
    %v1851 = vunpack.c.l.b16 %v1681
    %v1852 = vunpack.c.h.b16 %v1681
    %v1853 = vunpack.c.l.b16 %v1682
    %v1854 = vunpack.c.h.b16 %v1682
    %v1855 = vunpack.c.l.b16 %v1683
    %v1856 = vunpack.c.h.b16 %v1683
    %v1857 = vunpack.c.l.b16 %v1684
    %v1858 = vunpack.c.h.b16 %v1684
    %v1859 = vunpack.c.l.b16 %v1685
    %v1860 = vunpack.c.h.b16 %v1685
    %v1861 = vunpack.c.l.b16 %v1686
    %v1862 = vunpack.c.h.b16 %v1686
    %v1863 = vunpack.c.l.b16 %v1687
    %v1864 = vunpack.c.h.b16 %v1687
    %v1865 = vunpack.c.l.b16 %v1688
    %v1866 = vunpack.c.h.b16 %v1688
    %v1867 = vunpack.c.l.b16 %v1689
    %v1868 = vunpack.c.h.b16 %v1689
    %v1869 = vunpack.c.l.b16 %v1690
    %v1870 = vunpack.c.h.b16 %v1690
    %v1871 = vunpack.c.l.b16 %v1691
    %v1872 = vunpack.c.h.b16 %v1691
    %v1873 = vunpack.c.l.b16 %v1692
    %v1874 = vunpack.c.h.b16 %v1692
    %v1875 = vunpack.c.l.b16 %v1693
    %v1876 = vunpack.c.h.b16 %v1693
    %v1877 = vunpack.c.l.b16 %v1694
    %v1878 = vunpack.c.h.b16 %v1694
    %v1879 = vunpack.c.l.b16 %v1695
    %v1880 = vunpack.c.h.b16 %v1695
    %v1881 = vunpack.c.l.b16 %v1696
    %v1882 = vunpack.c.h.b16 %v1696
    %v1883 = vunpack.c.l.b16 %v1697
    %v1884 = vunpack.c.h.b16 %v1697
    %v1885 = vunpack.c.l.b16 %v1698
    %v1886 = vunpack.c.h.b16 %v1698
    %v1887 = vunpack.c.l.b16 %v1699
    %v1888 = vunpack.c.h.b16 %v1699
    %v1889 = vunpack.c.l.b16 %v1700
    %v1890 = vunpack.c.h.b16 %v1700
    %v1891 = vunpack.c.l.b16 %v1701
    %v1892 = vunpack.c.h.b16 %v1701
    %v1893 = vunpack.c.l.b16 %v1702
    %v1894 = vunpack.c.h.b16 %v1702
    %v1895 = vunpack.c.l.b16 %v1703
    %v1896 = vunpack.c.h.b16 %v1703
    %v1897 = vunpack.c.l.b16 %v1704
    %v1898 = vunpack.c.h.b16 %v1704
    %v1899 = vunpack.c.l.b16 %v1705
    %v1900 = vunpack.c.h.b16 %v1705
    %v1901 = vunpack.c.l.b16 %v1706
    %v1902 = vunpack.c.h.b16 %v1706
    %v1903 = vunpack.c.l.b16 %v1707
    %v1904 = vunpack.c.h.b16 %v1707
    %v1905 = vunpack.c.l.b16 %v1708
    %v1906 = vunpack.c.h.b16 %v1708
    %v1907 = vpack.c.b16 %v1781, %v1779
    %v1908 = vpack.c.b16 %v1782, %v1780
    %v1909 = vpack.c.b16 %v1785, %v1783
    %v1910 = vpack.c.b16 %v1786, %v1784
    %v1911 = vpack.c.b16 %v1789, %v1787
    %v1912 = vpack.c.b16 %v1790, %v1788
    %v1913 = vpack.c.b16 %v1793, %v1791
    %v1914 = vpack.c.b16 %v1794, %v1792
    %v1915 = vpack.c.b16 %v1797, %v1795
    %v1916 = vpack.c.b16 %v1798, %v1796
    %v1917 = vpack.c.b16 %v1801, %v1799
    %v1918 = vpack.c.b16 %v1802, %v1800
    %v1919 = vpack.c.b16 %v1805, %v1803
    %v1920 = vpack.c.b16 %v1806, %v1804
    %v1921 = vpack.c.b16 %v1809, %v1807
    %v1922 = vpack.c.b16 %v1810, %v1808
    %v1923 = vpack.c.b16 %v1813, %v1811
    %v1924 = vpack.c.b16 %v1814, %v1812
    %v1925 = vpack.c.b16 %v1817, %v1815
    %v1926 = vpack.c.b16 %v1818, %v1816
    %v1927 = vpack.c.b16 %v1821, %v1819
    %v1928 = vpack.c.b16 %v1822, %v1820
    %v1929 = vpack.c.b16 %v1825, %v1823
    %v1930 = vpack.c.b16 %v1826, %v1824
    %v1931 = vpack.c.b16 %v1829, %v1827
    %v1932 = vpack.c.b16 %v1830, %v1828
    %v1933 = vpack.c.b16 %v1833, %v1831
    %v1934 = vpack.c.b16 %v1834, %v1832
    %v1935 = vpack.c.b16 %v1837, %v1835
    %v1936 = vpack.c.b16 %v1838, %v1836
    %v1937 = vpack.c.b16 %v1841, %v1839
    %v1938 = vpack.c.b16 %v1842, %v1840
    %v1939 = vpack.c.b16 %v1845, %v1843
    %v1940 = vpack.c.b16 %v1846, %v1844
    %v1941 = vpack.c.b16 %v1849, %v1847
    %v1942 = vpack.c.b16 %v1850, %v1848
    %v1943 = vpack.c.b16 %v1853, %v1851
    %v1944 = vpack.c.b16 %v1854, %v1852
    %v1945 = vpack.c.b16 %v1857, %v1855
    %v1946 = vpack.c.b16 %v1858, %v1856
    %v1947 = vpack.c.b16 %v1861, %v1859
    %v1948 = vpack.c.b16 %v1862, %v1860
    %v1949 = vpack.c.b16 %v1865, %v1863
    %v1950 = vpack.c.b16 %v1866, %v1864
    %v1951 = vpack.c.b16 %v1869, %v1867
    %v1952 = vpack.c.b16 %v1870, %v1868
    %v1953 = vpack.c.b16 %v1873, %v1871
    %v1954 = vpack.c.b16 %v1874, %v1872
    %v1955 = vpack.c.b16 %v1877, %v1875
    %v1956 = vpack.c.b16 %v1878, %v1876
    %v1957 = vpack.c.b16 %v1881, %v1879
    %v1958 = vpack.c.b16 %v1882, %v1880
    %v1959 = vpack.c.b16 %v1885, %v1883
    %v1960 = vpack.c.b16 %v1886, %v1884
    %v1961 = vpack.c.b16 %v1889, %v1887
    %v1962 = vpack.c.b16 %v1890, %v1888
    %v1963 = vpack.c.b16 %v1893, %v1891
    %v1964 = vpack.c.b16 %v1894, %v1892
    %v1965 = vpack.c.b16 %v1897, %v1895
    %v1966 = vpack.c.b16 %v1898, %v1896
    %v1967 = vpack.c.b16 %v1901, %v1899
    %v1968 = vpack.c.b16 %v1902, %v1900
    %v1969 = vpack.c.b16 %v1905, %v1903
    %v1970 = vpack.c.b16 %v1906, %v1904
    %2035 = vmatpush.bf16.msra.mxu0 %v1921
    %2036 = vmatpush.bf16.msra.mxu0 %v1919
    %2037 = vmatpush.bf16.msra.mxu0 %v1917
    %2038 = vmatpush.bf16.msra.mxu0 %v1915
    %2039 = vmatpush.bf16.msra.mxu0 %v1913
    %2040 = vmatpush.bf16.msra.mxu0 %v1911
    %2041 = vmatpush.bf16.msra.mxu0 %v1909
    %2042 = vmatpush.bf16.msra.mxu0 %v1907
    %2043 = vmatmul.bf16.gmra.mxu0 %v1641
    %v2044 = vpop.f32.mrf.mxu0
    %v2045 = vadd.f32 %v1711, %v2044
    %v2046 = vpop.f32.mrf.mxu0
    %2047 = vdwg.mxu0
    %2048 = vmatpush.bf16.msra.mxu0 %v1937
    %2049 = vmatpush.bf16.msra.mxu0 %v1935
    %2050 = vmatpush.bf16.msra.mxu0 %v1933
    %2051 = vmatpush.bf16.msra.mxu0 %v1931
    %2052 = vmatpush.bf16.msra.mxu0 %v1929
    %2053 = vmatpush.bf16.msra.mxu0 %v1927
    %2054 = vmatpush.bf16.msra.mxu0 %v1925
    %2055 = vmatpush.bf16.msra.mxu0 %v1923
    %2056 = vmatmul.bf16.gmra.mxu0 %v1642
    %v2057 = vpop.f32.mrf.mxu0
    %v2058 = vadd.f32 %v2045, %v2057
    %v2059 = vpop.f32.mrf.mxu0
    %2060 = vdwg.mxu0
    %2061 = vmatpush.bf16.msra.mxu0 %v1953
    %2062 = vmatpush.bf16.msra.mxu0 %v1951
    %2063 = vmatpush.bf16.msra.mxu0 %v1949
    %2064 = vmatpush.bf16.msra.mxu0 %v1947
    %2065 = vmatpush.bf16.msra.mxu0 %v1945
    %2066 = vmatpush.bf16.msra.mxu0 %v1943
    %2067 = vmatpush.bf16.msra.mxu0 %v1941
    %2068 = vmatpush.bf16.msra.mxu0 %v1939
    %2069 = vmatmul.bf16.gmra.mxu0 %v1643
    %v2070 = vpop.f32.mrf.mxu0
    %v2071 = vadd.f32 %v2058, %v2070
    %v2072 = vpop.f32.mrf.mxu0
    %2073 = vdwg.mxu0
    %2074 = vmatpush.bf16.msra.mxu0 %v1969
    %2075 = vmatpush.bf16.msra.mxu0 %v1967
    %2076 = vmatpush.bf16.msra.mxu0 %v1965
    %2077 = vmatpush.bf16.msra.mxu0 %v1963
    %2078 = vmatpush.bf16.msra.mxu0 %v1961
    %2079 = vmatpush.bf16.msra.mxu0 %v1959
    %2080 = vmatpush.bf16.msra.mxu0 %v1957
    %2081 = vmatpush.bf16.msra.mxu0 %v1955
    %2082 = vmatmul.bf16.gmra.mxu0 %v1644
    %v2083 = vpop.f32.mrf.mxu0
    %v2084 = vadd.f32 %v2071, %v2083
    %v2085 = vpop.f32.mrf.mxu0
    %2086 = vdwg.mxu0
    %2087 = vmatpush.bf16.msra.mxu0 %v1922
    %2088 = vmatpush.bf16.msra.mxu0 %v1920
    %2089 = vmatpush.bf16.msra.mxu0 %v1918
    %2090 = vmatpush.bf16.msra.mxu0 %v1916
    %2091 = vmatpush.bf16.msra.mxu0 %v1914
    %2092 = vmatpush.bf16.msra.mxu0 %v1912
    %2093 = vmatpush.bf16.msra.mxu0 %v1910
    %2094 = vmatpush.bf16.msra.mxu0 %v1908
    %2095 = vmatmul.bf16.gmra.mxu0 %v1641
    %v2096 = vpop.f32.mrf.mxu0
    %v2097 = vadd.f32 %v1712, %v2096
    %v2098 = vpop.f32.mrf.mxu0
    %2099 = vdwg.mxu0
    %2100 = vmatpush.bf16.msra.mxu0 %v1938
    %2101 = vmatpush.bf16.msra.mxu0 %v1936
    %2102 = vmatpush.bf16.msra.mxu0 %v1934
    %2103 = vmatpush.bf16.msra.mxu0 %v1932
    %2104 = vmatpush.bf16.msra.mxu0 %v1930
    %2105 = vmatpush.bf16.msra.mxu0 %v1928
    %2106 = vmatpush.bf16.msra.mxu0 %v1926
    %2107 = vmatpush.bf16.msra.mxu0 %v1924
    %2108 = vmatmul.bf16.gmra.mxu0 %v1642
    %v2109 = vpop.f32.mrf.mxu0
    %v2110 = vadd.f32 %v2097, %v2109
    %v2111 = vpop.f32.mrf.mxu0
    %2112 = vdwg.mxu0
    %2113 = vmatpush.bf16.msra.mxu0 %v1954
    %2114 = vmatpush.bf16.msra.mxu0 %v1952
    %2115 = vmatpush.bf16.msra.mxu0 %v1950
    %2116 = vmatpush.bf16.msra.mxu0 %v1948
    %2117 = vmatpush.bf16.msra.mxu0 %v1946
    %2118 = vmatpush.bf16.msra.mxu0 %v1944
    %2119 = vmatpush.bf16.msra.mxu0 %v1942
    %2120 = vmatpush.bf16.msra.mxu0 %v1940
    %2121 = vmatmul.bf16.gmra.mxu0 %v1643
    %v2122 = vpop.f32.mrf.mxu0
    %v2123 = vadd.f32 %v2110, %v2122
    %v2124 = vpop.f32.mrf.mxu0
    %2125 = vdwg.mxu0
    %2126 = vmatpush.bf16.msra.mxu0 %v1970
    %2127 = vmatpush.bf16.msra.mxu0 %v1968
    %2128 = vmatpush.bf16.msra.mxu0 %v1966
    %2129 = vmatpush.bf16.msra.mxu0 %v1964
    %2130 = vmatpush.bf16.msra.mxu0 %v1962
    %2131 = vmatpush.bf16.msra.mxu0 %v1960
    %2132 = vmatpush.bf16.msra.mxu0 %v1958
    %2133 = vmatpush.bf16.msra.mxu0 %v1956
    %2134 = vmatmul.bf16.gmra.mxu0 %v1644
    %v2135 = vpop.f32.mrf.mxu0
    %v2136 = vadd.f32 %v2123, %v2135
    %v2137 = vpop.f32.mrf.mxu0
    %2138 = vdwg.mxu0
    %vm2139 = vcmp.gt.f32.partialorder %v2084, 0.0
    %vm2140 = vcmp.gt.f32.partialorder %v2136, 0.0
    %v2141 = vmul.f32 %v2084, 0.2
    %v2142 = vmul.f32 %v2136, 0.2
    %v2143 = vsel %vm2139, %v2084, %v2141
    %v2144 = vsel %vm2140, %v2136, %v2142
    %v2145 = vld [vmem:[%s5] sm:$0x3]
    %v2147 = vperm.slane %v2145, 0
    %v2148 = vperm.slane %v2145, 1
    %v2151 = vmul.f32 %v2143, %v2147
    %v2152 = vmul.f32 %v2144, %v2148
    %v2153 = vadd.f32 %v2151, %v2152
    %2154 = vadd.xlane.f32.xlu0 %v2153
    %v2155 = vpop.xlane.xlu0 %2154
    %v2156 = vld [vmem:[#allocation2] sm:$0x1]
    %v2158 = vperm.slane %v2156, 0
    %v2160 = vadd.f32 %v2155, %v2158
    %v2161 = vxor.u32 %v2160, 2147483648
    %v2162 = vmul.f32 %v2161, 1.442695
    %v2163 = vpow.pop %v2162
    %v2164 = vadd.f32 %v2163, 1.0
    %v2165 = vrcp.pop %v2164
    %v2166 = vmul.f32 %v2164, %v2165
    %v2167 = vsub.f32 1.0, %v2166
    %v2168 = vmul.f32 %v2165, %v2167
    %v2169 = vadd.f32 %v2165, %v2168
    %vm2170 = vweird.f32 %v2164
    %vm2171 = vweird.f32 %v2165
    %vm2172 = vmor %vm2170, %vm2171
    %v2173 = vsel %vm2172, %v2165, %v2169
    %v2174 = vand.u32 2147483647, %v2164
    %vm2175 = vcmp.eq.f32.partialorder %v2174, 8.507059e+37
    %v2176 = vand.u32 %v2164, 2147483648
    %v2177 = vor.u32 1.1754944e-38, %v2176
    %v2178 = vsel %vm2175, %v2177, %v2173
    %v2179 = vmul.f32 1.0, %v2178
    %vm2180 = vcmask 7168
    %2181 = vst.msk [vmem:[%s7] sm:$0xff] %vm2180, %v2179
    // Predicated region
    $region38: #{discriminator_forward.1} parent=1 // pred_check
      _
    $region39: #{discriminator_forward.1} parent=1 // pred_check_branch
      %2183 = sbr.rel (0) target = $region41
    $region40: #{discriminator_forward.1} parent=1 // pred_region
      _
    $region41: #{discriminator_forward.1} parent=1 // pred_fallthru
      _
    // Predicated region
    $region42: #{discriminator_forward.1} parent=1 // pred_check
      _
    $region43: #{discriminator_forward.1} parent=1 // pred_check_branch
      %2185 = sbr.rel (0) target = $region45
    $region44: #{discriminator_forward.1} parent=1 // pred_region
      _
    $region45: #{discriminator_forward.1} parent=1 // pred_fallthru
      _
    %2186 = vsyncpa [#allocation4], 1
    %2187 = vsyncpa [#allocation6], 1

</llo_original>
